<compile_context>
chip_gen: v7x
topology: tpu7x:2x2x1
jax: 0.10.0
libtpu: 0.0.40
codegen_flags: <defaults>
</compile_context>

<pallas_src>
import jax
import jax.numpy as jnp
from jax.experimental import pallas as pl
from jax.experimental.pallas import tpu as pltpu


def _round_up(x, m):
    return (x + m - 1) // m * m


# ----------------------------------------------------------------------------
# im2col + single MXU matmul for a 3x3, pad=1 conv of one image.
# ----------------------------------------------------------------------------
def _build_patches(x_ref, p_ref):
    """Writes the im2col patches of one image straight into VMEM.

    x_ref : (1, H, W, Cin)  f32 input image
    p_ref : (H, W, K_pad)   f32 scratch; tap (kh, kw) occupies lanes
            [(3*kh+kw)*Cin, (3*kh+kw)*Cin + Cin); remaining lanes stay zero so
            they contract against the zero-padded weight rows.
    """
    _, H, W, Cin = x_ref.shape
    # One lane-dense, unmasked zero of the whole scratch (covers both the
    # 1-pixel conv halo and the K padding lanes); interiors are overwritten.
    # Re-done every grid step because with "parallel" (megacore) sharding each
    # core owns its own scratch.
    p_ref[...] = jnp.zeros_like(p_ref)
    for kh in range(3):
        dh = kh - 1
        h0, h1 = max(0, -dh), min(H, H - dh)          # valid destination rows
        for kw in range(3):
            dw = kw - 1
            w0, w1 = max(0, -dw), min(W, W - dw)      # valid destination cols
            c0 = (3 * kh + kw) * Cin
            p_ref[h0:h1, w0:w1, c0:c0 + Cin] = (
                x_ref[0, h0 + dh:h1 + dh, w0 + dw:w1 + dw, :])


def _conv3x3(x_ref, wmat_ref, p_ref):
    """Returns the (H*W, C_pad) f32 conv output for one image (no bias)."""
    _, H, W, _ = x_ref.shape
    K_pad = p_ref.shape[-1]
    _build_patches(x_ref, p_ref)
    # (H, W, K_pad) -> (H*W, K_pad) is relayout-free for W % 8 == 0.
    patches = p_ref[...].reshape(H * W, K_pad).astype(jnp.bfloat16)
    return jnp.dot(patches, wmat_ref[...], preferred_element_type=jnp.float32)


# ----------------------------------------------------------------------------
# Kernel 1: conv -> per-image (channel sum, centered M2) BN partials.
#           Full-res activation never leaves VMEM; outputs are (1,1,C_pad).
# ----------------------------------------------------------------------------
def _conv_stats_kernel(x_ref, wmat_ref, psum_ref, pm2_ref, p_ref):
    _, H, W, _ = x_ref.shape
    C_pad = wmat_ref.shape[1]
    c = _conv3x3(x_ref, wmat_ref, p_ref)                     # (H*W, C_pad)
    s = jnp.sum(c, axis=0, keepdims=True)                    # (1, C_pad)
    mean_i = s * (1.0 / (H * W))
    d = c - mean_i
    psum_ref[...] = s.reshape(1, 1, C_pad)
    pm2_ref[...] = jnp.sum(d * d, axis=0, keepdims=True).reshape(1, 1, C_pad)


# ----------------------------------------------------------------------------
# Kernel 2: conv -> BN affine (precomputed scale/shift) -> ReLU -> 2x2 avgpool
#           fully fused; only the 4x-smaller pooled output is written to HBM.
# ----------------------------------------------------------------------------
def _conv_bn_relu_pool_kernel(x_ref, wmat_ref, scale_ref, shift_ref, o_ref,
                              p_ref, z_ref):
    _, H, W, _ = x_ref.shape
    C_pad = wmat_ref.shape[1]
    c = _conv3x3(x_ref, wmat_ref, p_ref)                     # (H*W, C_pad)
    z_ref[...] = jnp.maximum(c * scale_ref[...] + shift_ref[...], 0.0)

    # 2x2 average pool.  W is even, so even/odd w positions are the even/odd
    # rows of the row-major (H*W, C_pad) layout: two sublane-strided ref loads
    # pool W with no relayout.
    half = (H * W) // 2
    wsum = (z_ref[pl.ds(0, half, stride=2), :] +
            z_ref[pl.ds(1, half, stride=2), :])              # (H*W//2, C_pad)
    # Rows of wsum are ordered (h, w2); a leading-axis split + sum pools H.
    # Relayout-free when (W//2) % 8 == 0; otherwise still correct, just an XLU
    # relayout of the already-small pooled tensor.
    pooled = 0.25 * wsum.reshape(H // 2, 2, W // 2, C_pad).sum(axis=1)
    o_ref[...] = pooled[None].astype(o_ref.dtype)


# ----------------------------------------------------------------------------
# Wrapper (NCHW in / NCHW out, like the PyTorch module)
# ----------------------------------------------------------------------------
def block_c_forward(x_nchw, w_oihw, b, gamma, beta, eps=1e-5):
    N, Cin, H, W = x_nchw.shape
    Cout = w_oihw.shape[0]
    assert H % 2 == 0 and W % 2 == 0, "AvgPool2d(2) path assumes even H, W"
    # Conv bias has exactly zero effect under training-mode BatchNorm
    # ((c + b) - mean(c + b) == c - mean(c)); it is folded out of the kernels.
    del b

    K = 9 * Cin
    K_pad = _round_up(K, 128)
    C_pad = _round_up(Cout, 128)
    Hp, Wp = H // 2, W // 2

    # NHWC input; channels live on the lane axis inside the kernels.
    x = jnp.transpose(x_nchw, (0, 2, 3, 1)).astype(jnp.float32)
    # (Cout,Cin,3,3) -> (kh,kw,ci,co) -> (9*Cin, Cout), zero-padded to
    # (K_pad, C_pad) and cast to bf16 (MXU-native operands; f32 accumulate).
    wmat = jnp.transpose(w_oihw, (2, 3, 1, 0)).astype(jnp.float32)
    wmat = wmat.reshape(K, Cout)
    wmat = jnp.pad(wmat, ((0, K_pad - K), (0, C_pad - Cout))).astype(jnp.bfloat16)

    # Per-step VMEM footprint (double-buffered I/O blocks + scratch) with 2x
    # headroom for Mosaic internals; keeps us well under v7x's 64 MiB VMEM.
    step_bytes = (
        2 * H * W * Cin * 4            # x block (double-buffered)
        + 2 * K_pad * C_pad * 2        # weights (bf16)
        + 4 * C_pad * 4                # scale + shift blocks
        + 2 * Hp * Wp * C_pad * 4      # pooled output block
        + 4 * C_pad * 4                # psum + pm2 blocks
        + H * W * K_pad * 4            # patches scratch
        + H * W * C_pad * 4)           # z scratch
    vmem_limit = int(min(max(2 * step_bytes, 4 << 20), 32 << 20))

    common_params = pltpu.CompilerParams(
        dimension_semantics=("parallel",),
        vmem_limit_bytes=vmem_limit)

    x_spec = pl.BlockSpec((1, H, W, Cin), lambda n: (n, 0, 0, 0))
    w_spec = pl.BlockSpec((K_pad, C_pad), lambda n: (0, 0))
    vec_spec = pl.BlockSpec((1, C_pad), lambda n: (0, 0))
    stat_spec = pl.BlockSpec((1, 1, C_pad), lambda n: (n, 0, 0))

    # ---- Pass 1: per-image BN partials (sum, centered M2) -------------------
    stats_call = pl.pallas_call(
        _conv_stats_kernel,
        out_shape=(
            jax.ShapeDtypeStruct((N, 1, C_pad), jnp.float32),
            jax.ShapeDtypeStruct((N, 1, C_pad), jnp.float32),
        ),
        grid_spec=pltpu.PrefetchScalarGridSpec(
            num_scalar_prefetch=0,
            grid=(N,),
            in_specs=[x_spec, w_spec],
            out_specs=(stat_spec, stat_spec),
            scratch_shapes=[pltpu.VMEM((H, W, K_pad), jnp.float32)],
        ),
        compiler_params=common_params,
    )
    psum, pm2 = stats_call(x, wmat)

    # Chan/Welford combine of per-image partials (robust: no E[x^2]-E[x]^2
    # cancellation).  Biased batch variance, matching training-mode BatchNorm2d.
    hw = jnp.float32(H * W)
    cnt = jnp.float32(N * H * W)
    mean_i = psum[:, 0, :] / hw                               # (N, C_pad)
    mean_c = jnp.sum(psum[:, 0, :], axis=0) / cnt             # (C_pad,)
    m2 = jnp.sum(pm2[:, 0, :], axis=0) + hw * jnp.sum(
        (mean_i - mean_c[None, :]) ** 2, axis=0)
    var = m2 / cnt

    gamma_p = jnp.pad(gamma.astype(jnp.float32), (0, C_pad - Cout))
    beta_p = jnp.pad(beta.astype(jnp.float32), (0, C_pad - Cout))
    scale_v = gamma_p * jax.lax.rsqrt(var + eps)
    shift_v = beta_p - mean_c * scale_v
    scale = scale_v.reshape(1, C_pad)
    shift = shift_v.reshape(1, C_pad)

    # ---- Pass 2: fused conv + BN-affine + ReLU + 2x2 avg-pool ----------------
    fused_call = pl.pallas_call(
        _conv_bn_relu_pool_kernel,
        out_shape=jax.ShapeDtypeStruct((N, Hp, Wp, C_pad), jnp.float32),
        grid_spec=pltpu.PrefetchScalarGridSpec(
            num_scalar_prefetch=0,
            grid=(N,),
            in_specs=[x_spec, w_spec, vec_spec, vec_spec],
            out_specs=pl.BlockSpec((1, Hp, Wp, C_pad), lambda n: (n, 0, 0, 0)),
            scratch_shapes=[
                pltpu.VMEM((H, W, K_pad), jnp.float32),
                pltpu.VMEM((H * W, C_pad), jnp.float32),
            ],
        ),
        compiler_params=common_params,
    )
    out_nhwc = fused_call(x, wmat, scale, shift)
    # Drop the channel padding and return PyTorch-style NCHW.
    return jnp.transpose(out_nhwc[..., :Cout], (0, 3, 1, 2))


# ----------------------------------------------------------------------------
# Pure-JAX reference (correctness sanity check)
# ----------------------------------------------------------------------------
def _reference(x_nchw, w_oihw, b, gamma, beta, eps=1e-5):
    y = jax.lax.conv_general_dilated(
        x_nchw, w_oihw, window_strides=(1, 1), padding=((1, 1), (1, 1)),
        dimension_numbers=("NCHW", "OIHW", "NCHW"))
    y = y + b[None, :, None, None]
    mean = y.mean(axis=(0, 2, 3), keepdims=True)
    var = ((y - mean) ** 2).mean(axis=(0, 2, 3), keepdims=True)
    z = (y - mean) / jnp.sqrt(var + eps)
    z = z * gamma[None, :, None, None] + beta[None, :, None, None]
    z = jnp.maximum(z, 0.0)
    N, C, H, W = z.shape
    return z.reshape(N, C, H // 2, 2, W // 2, 2).mean(axis=(3, 5))


if __name__ == "__main__":
    N, Cin, Cout, H, W = 2, 4, 8, 16, 16

    key = jax.random.PRNGKey(0)
    kx, kw, kb = jax.random.split(key, 3)
    x = jax.random.normal(kx, (N, Cin, H, W), dtype=jnp.float32)
    # Deterministic synthetic parameters (shapes match nn.Conv2d / nn.BatchNorm2d).
    conv_w = 0.1 * jax.random.normal(kw, (Cout, Cin, 3, 3), dtype=jnp.float32)
    conv_b = 0.05 * jax.random.normal(kb, (Cout,), dtype=jnp.float32)
    bn_gamma = jnp.ones((Cout,), jnp.float32)     # PyTorch default init
    bn_beta = jnp.zeros((Cout,), jnp.float32)     # PyTorch default init

    out = block_c_forward(x, conv_w, conv_b, bn_gamma, bn_beta)
    out = jax.block_until_ready(out)

    ref = _reference(x, conv_w, conv_b, bn_gamma, bn_beta)
    assert out.shape == (N, Cout, H // 2, W // 2), out.shape
    # bf16 MXU operands (f32 accumulation) -> tolerance loosened vs pure f32.
    err = float(jnp.max(jnp.abs(out - ref)))
    assert jnp.allclose(out, ref, atol=2e-2, rtol=2e-2), err

    print("KERNEL_OK")
</pallas_src>

<mosaic_0001>
module attributes {stable_mosaic.version = 11 : i64} {
  func.func @_conv_stats_kernel(%arg0: i32, %arg1: memref<1x16x16x4xf32, #tpu.memory_space<vmem>>, %arg2: memref<128x128xbf16, #tpu.memory_space<vmem>>, %arg3: memref<1x1x128xf32, #tpu.memory_space<vmem>>, %arg4: memref<1x1x128xf32, #tpu.memory_space<vmem>>, %arg5: memref<16x16x128xf32, #tpu.memory_space<vmem>>) attributes {dimension_semantics = [#tpu.dimension_semantics<parallel>], iteration_bounds = array<i64: 2>, scalar_prefetch = 0 : i64, scratch_operands = 1 : i64, tpu.core_type = #tpu.core_type<tc>, window_params = [{transform_indices = @transform_0, window_bounds = array<i64: 1, 16, 16, 4>}, {pipeline_mode = #tpu.pipeline_mode<synchronous>, transform_indices = @transform_1, window_bounds = array<i64: 128, 128>}, {transform_indices = @transform_2, window_bounds = array<i64: 1, 1, 128>}, {transform_indices = @transform_3, window_bounds = array<i64: 1, 1, 128>}]} {
    %cst = arith.constant 0.000000e+00 : f32
    %0 = vector.broadcast %cst : f32 to vector<16x16x128xf32>
    %c0 = arith.constant 0 : index
    %c0_0 = arith.constant 0 : index
    %c0_1 = arith.constant 0 : index
    %1 = vector.load %arg5[%c0, %c0_0, %c0_1] : memref<16x16x128xf32, #tpu.memory_space<vmem>>, vector<16x16x128xf32>
    tpu.vector_store %arg5[%c0, %c0_0, %c0_1], %0 {strides = array<i32>} : memref<16x16x128xf32, #tpu.memory_space<vmem>>, vector<16x16x128xf32>,
    %c0_2 = arith.constant 0 : index
    %c0_3 = arith.constant 0 : index
    %c0_4 = arith.constant 0 : index
    %c0_5 = arith.constant 0 : index
    %2 = vector.load %arg1[%c0_2, %c0_3, %c0_4, %c0_5] : memref<1x16x16x4xf32, #tpu.memory_space<vmem>>, vector<1x15x15x4xf32>
    %3 = vector.shape_cast %2 : vector<1x15x15x4xf32> to vector<15x15x4xf32>
    %c1 = arith.constant 1 : index
    %c1_6 = arith.constant 1 : index
    %c0_7 = arith.constant 0 : index
    %4 = vector.load %arg5[%c1, %c1_6, %c0_7] : memref<16x16x128xf32, #tpu.memory_space<vmem>>, vector<15x15x4xf32>
    tpu.vector_store %arg5[%c1, %c1_6, %c0_7], %3 {strides = array<i32>} : memref<16x16x128xf32, #tpu.memory_space<vmem>>, vector<15x15x4xf32>,
    %c0_8 = arith.constant 0 : index
    %c0_9 = arith.constant 0 : index
    %c0_10 = arith.constant 0 : index
    %c0_11 = arith.constant 0 : index
    %5 = vector.load %arg1[%c0_8, %c0_9, %c0_10, %c0_11] : memref<1x16x16x4xf32, #tpu.memory_space<vmem>>, vector<1x15x16x4xf32>
    %6 = vector.shape_cast %5 : vector<1x15x16x4xf32> to vector<15x16x4xf32>
    %c1_12 = arith.constant 1 : index
    %c0_13 = arith.constant 0 : index
    %c4 = arith.constant 4 : index
    %7 = vector.load %arg5[%c1_12, %c0_13, %c4] : memref<16x16x128xf32, #tpu.memory_space<vmem>>, vector<15x16x4xf32>
    tpu.vector_store %arg5[%c1_12, %c0_13, %c4], %6 {strides = array<i32>} : memref<16x16x128xf32, #tpu.memory_space<vmem>>, vector<15x16x4xf32>,
    %c0_14 = arith.constant 0 : index
    %c0_15 = arith.constant 0 : index
    %c1_16 = arith.constant 1 : index
    %c0_17 = arith.constant 0 : index
    %8 = vector.load %arg1[%c0_14, %c0_15, %c1_16, %c0_17] : memref<1x16x16x4xf32, #tpu.memory_space<vmem>>, vector<1x15x15x4xf32>
    %9 = vector.shape_cast %8 : vector<1x15x15x4xf32> to vector<15x15x4xf32>
    %c1_18 = arith.constant 1 : index
    %c0_19 = arith.constant 0 : index
    %c8 = arith.constant 8 : index
    %10 = vector.load %arg5[%c1_18, %c0_19, %c8] : memref<16x16x128xf32, #tpu.memory_space<vmem>>, vector<15x15x4xf32>
    tpu.vector_store %arg5[%c1_18, %c0_19, %c8], %9 {strides = array<i32>} : memref<16x16x128xf32, #tpu.memory_space<vmem>>, vector<15x15x4xf32>,
    %c0_20 = arith.constant 0 : index
    %c0_21 = arith.constant 0 : index
    %c0_22 = arith.constant 0 : index
    %c0_23 = arith.constant 0 : index
    %11 = vector.load %arg1[%c0_20, %c0_21, %c0_22, %c0_23] : memref<1x16x16x4xf32, #tpu.memory_space<vmem>>, vector<1x16x15x4xf32>
    %12 = vector.shape_cast %11 : vector<1x16x15x4xf32> to vector<16x15x4xf32>
    %c0_24 = arith.constant 0 : index
    %c1_25 = arith.constant 1 : index
    %c12 = arith.constant 12 : index
    %13 = vector.load %arg5[%c0_24, %c1_25, %c12] : memref<16x16x128xf32, #tpu.memory_space<vmem>>, vector<16x15x4xf32>
    tpu.vector_store %arg5[%c0_24, %c1_25, %c12], %12 {strides = array<i32>} : memref<16x16x128xf32, #tpu.memory_space<vmem>>, vector<16x15x4xf32>,
    %c0_26 = arith.constant 0 : index
    %c0_27 = arith.constant 0 : index
    %c0_28 = arith.constant 0 : index
    %c0_29 = arith.constant 0 : index
    %14 = vector.load %arg1[%c0_26, %c0_27, %c0_28, %c0_29] : memref<1x16x16x4xf32, #tpu.memory_space<vmem>>, vector<1x16x16x4xf32>
    %15 = vector.shape_cast %14 : vector<1x16x16x4xf32> to vector<16x16x4xf32>
    %c0_30 = arith.constant 0 : index
    %c0_31 = arith.constant 0 : index
    %c16 = arith.constant 16 : index
    %16 = vector.load %arg5[%c0_30, %c0_31, %c16] : memref<16x16x128xf32, #tpu.memory_space<vmem>>, vector<16x16x4xf32>
    tpu.vector_store %arg5[%c0_30, %c0_31, %c16], %15 {strides = array<i32>} : memref<16x16x128xf32, #tpu.memory_space<vmem>>, vector<16x16x4xf32>,
    %c0_32 = arith.constant 0 : index
    %c0_33 = arith.constant 0 : index
    %c1_34 = arith.constant 1 : index
    %c0_35 = arith.constant 0 : index
    %17 = vector.load %arg1[%c0_32, %c0_33, %c1_34, %c0_35] : memref<1x16x16x4xf32, #tpu.memory_space<vmem>>, vector<1x16x15x4xf32>
    %18 = vector.shape_cast %17 : vector<1x16x15x4xf32> to vector<16x15x4xf32>
    %c0_36 = arith.constant 0 : index
    %c0_37 = arith.constant 0 : index
    %c20 = arith.constant 20 : index
    %19 = vector.load %arg5[%c0_36, %c0_37, %c20] : memref<16x16x128xf32, #tpu.memory_space<vmem>>, vector<16x15x4xf32>
    tpu.vector_store %arg5[%c0_36, %c0_37, %c20], %18 {strides = array<i32>} : memref<16x16x128xf32, #tpu.memory_space<vmem>>, vector<16x15x4xf32>,
    %c0_38 = arith.constant 0 : index
    %c1_39 = arith.constant 1 : index
    %c0_40 = arith.constant 0 : index
    %c0_41 = arith.constant 0 : index
    %20 = vector.load %arg1[%c0_38, %c1_39, %c0_40, %c0_41] : memref<1x16x16x4xf32, #tpu.memory_space<vmem>>, vector<1x15x15x4xf32>
    %21 = vector.shape_cast %20 : vector<1x15x15x4xf32> to vector<15x15x4xf32>
    %c0_42 = arith.constant 0 : index
    %c1_43 = arith.constant 1 : index
    %c24 = arith.constant 24 : index
    %22 = vector.load %arg5[%c0_42, %c1_43, %c24] : memref<16x16x128xf32, #tpu.memory_space<vmem>>, vector<15x15x4xf32>
    tpu.vector_store %arg5[%c0_42, %c1_43, %c24], %21 {strides = array<i32>} : memref<16x16x128xf32, #tpu.memory_space<vmem>>, vector<15x15x4xf32>,
    %c0_44 = arith.constant 0 : index
    %c1_45 = arith.constant 1 : index
    %c0_46 = arith.constant 0 : index
    %c0_47 = arith.constant 0 : index
    %23 = vector.load %arg1[%c0_44, %c1_45, %c0_46, %c0_47] : memref<1x16x16x4xf32, #tpu.memory_space<vmem>>, vector<1x15x16x4xf32>
    %24 = vector.shape_cast %23 : vector<1x15x16x4xf32> to vector<15x16x4xf32>
    %c0_48 = arith.constant 0 : index
    %c0_49 = arith.constant 0 : index
    %c28 = arith.constant 28 : index
    %25 = vector.load %arg5[%c0_48, %c0_49, %c28] : memref<16x16x128xf32, #tpu.memory_space<vmem>>, vector<15x16x4xf32>
    tpu.vector_store %arg5[%c0_48, %c0_49, %c28], %24 {strides = array<i32>} : memref<16x16x128xf32, #tpu.memory_space<vmem>>, vector<15x16x4xf32>,
    %c0_50 = arith.constant 0 : index
    %c1_51 = arith.constant 1 : index
    %c1_52 = arith.constant 1 : index
    %c0_53 = arith.constant 0 : index
    %26 = vector.load %arg1[%c0_50, %c1_51, %c1_52, %c0_53] : memref<1x16x16x4xf32, #tpu.memory_space<vmem>>, vector<1x15x15x4xf32>
    %27 = vector.shape_cast %26 : vector<1x15x15x4xf32> to vector<15x15x4xf32>
    %c0_54 = arith.constant 0 : index
    %c0_55 = arith.constant 0 : index
    %c32 = arith.constant 32 : index
    %28 = vector.load %arg5[%c0_54, %c0_55, %c32] : memref<16x16x128xf32, #tpu.memory_space<vmem>>, vector<15x15x4xf32>
    tpu.vector_store %arg5[%c0_54, %c0_55, %c32], %27 {strides = array<i32>} : memref<16x16x128xf32, #tpu.memory_space<vmem>>, vector<15x15x4xf32>,
    %c0_56 = arith.constant 0 : index
    %c0_57 = arith.constant 0 : index
    %c0_58 = arith.constant 0 : index
    %29 = vector.load %arg5[%c0_56, %c0_57, %c0_58] : memref<16x16x128xf32, #tpu.memory_space<vmem>>, vector<16x16x128xf32>
    %30 = vector.shape_cast %29 : vector<16x16x128xf32> to vector<256x128xf32>
    %31 = arith.truncf %30 : vector<256x128xf32> to vector<256x128xbf16>
    %c0_59 = arith.constant 0 : index
    %c0_60 = arith.constant 0 : index
    %32 = vector.load %arg2[%c0_59, %c0_60] : memref<128x128xbf16, #tpu.memory_space<vmem>>, vector<128x128xbf16>
    %cst_61 = arith.constant dense<0.000000e+00> : vector<256x128xf32>
    %33 = tpu.matmul %31, %32, %cst_61 {dimension_numbers = #tpu.dot_dimension_numbers<[1], [0], [0], [1], [0, 0, 1, 1], [], []>} : vector<256x128xbf16>, vector<128x128xbf16>, vector<256x128xf32> -> vector<256x128xf32>
    %cst_62 = arith.constant dense<0.000000e+00> : vector<128xf32>
    %34 = vector.multi_reduction <add>, %33, %cst_62 [0] : vector<256x128xf32> to vector<128xf32>
    %35 = vector.shape_cast %34 : vector<128xf32> to vector<1x128xf32>
    %cst_63 = arith.constant 3.906250e-03 : f32
    %36 = vector.broadcast %cst_63 : f32 to vector<1x128xf32>
    %37 = arith.mulf %35, %36 : vector<1x128xf32>
    %38 = vector.broadcast %37 : vector<1x128xf32> to vector<256x128xf32>
    %39 = arith.subf %33, %38 : vector<256x128xf32>
    %40 = vector.shape_cast %35 : vector<1x128xf32> to vector<1x1x128xf32>
    %c0_64 = arith.constant 0 : index
    %c0_65 = arith.constant 0 : index
    %c0_66 = arith.constant 0 : index
    %41 = vector.load %arg3[%c0_64, %c0_65, %c0_66] : memref<1x1x128xf32, #tpu.memory_space<vmem>>, vector<1x1x128xf32>
    tpu.vector_store %arg3[%c0_64, %c0_65, %c0_66], %40 {strides = array<i32>} : memref<1x1x128xf32, #tpu.memory_space<vmem>>, vector<1x1x128xf32>,
    %42 = arith.mulf %39, %39 : vector<256x128xf32>
    %cst_67 = arith.constant dense<0.000000e+00> : vector<128xf32>
    %43 = vector.multi_reduction <add>, %42, %cst_67 [0] : vector<256x128xf32> to vector<128xf32>
    %44 = vector.shape_cast %43 : vector<128xf32> to vector<1x128xf32>
    %45 = vector.shape_cast %44 : vector<1x128xf32> to vector<1x1x128xf32>
    %c0_68 = arith.constant 0 : index
    %c0_69 = arith.constant 0 : index
    %c0_70 = arith.constant 0 : index
    %46 = vector.load %arg4[%c0_68, %c0_69, %c0_70] : memref<1x1x128xf32, #tpu.memory_space<vmem>>, vector<1x1x128xf32>
    tpu.vector_store %arg4[%c0_68, %c0_69, %c0_70], %45 {strides = array<i32>} : memref<1x1x128xf32, #tpu.memory_space<vmem>>, vector<1x1x128xf32>,
    return
  }
  func.func @transform_0(%arg0: i32) -> (i32, i32, i32, i32) {
    %c0_i32 = arith.constant 0 : i32
    %c0_i32_0 = arith.constant 0 : i32
    %c0_i32_1 = arith.constant 0 : i32
    %c0_i32_2 = arith.constant 0 : i32
    return %arg0, %c0_i32, %c0_i32_0, %c0_i32_1 : i32, i32, i32, i32
  }
  func.func @transform_1(%arg0: i32) -> (i32, i32) {
    %c0_i32 = arith.constant 0 : i32
    %c0_i32_0 = arith.constant 0 : i32
    %c0_i32_1 = arith.constant 0 : i32
    return %c0_i32, %c0_i32_0 : i32, i32
  }
  func.func @transform_2(%arg0: i32) -> (i32, i32, i32) {
    %c0_i32 = arith.constant 0 : i32
    %c0_i32_0 = arith.constant 0 : i32
    %c0_i32_1 = arith.constant 0 : i32
    return %arg0, %c0_i32, %c0_i32_0 : i32, i32, i32
  }
  func.func @transform_3(%arg0: i32) -> (i32, i32, i32) {
    %c0_i32 = arith.constant 0 : i32
    %c0_i32_0 = arith.constant 0 : i32
    %c0_i32_1 = arith.constant 0 : i32
    return %arg0, %c0_i32, %c0_i32_0 : i32, i32, i32
  }
}

</mosaic_0001>

<llo_original>
// kernel: tpu_custom_call.1
$region0: #{tpu_custom_call.1}
  #allocation0 [shape = 'u32[]', space=smem, size = 0x4, offset = 0x4, fixed_abs, tag = 'smem constant byte address 0x4 - core index']
  #allocation1 [shape = 'u32[144,128]{1,0:T(1,128)}', space=vmem, size = 0x12000, scoped, tag = 'internal scratch']
  #allocation2 [shape = 'f32[16,16,128]{2,1,0:T(8,128)}', space=vmem, size = 0x20000, scoped, tag = 'scratch operand']
  %s0 = inlined_call_operand.vmem [shape: f32[2,16,16,4], index: 0, kind: input, shape index: {}]
  %s1 = inlined_call_operand.vmem [shape: bf16[128,128], index: 1, kind: input, shape index: {}]
  %s2 = inlined_call_operand.hbm [shape: f32[2,1,128], index: 2, kind: output, shape index: {0}]
  %s3 = inlined_call_operand.hbm [shape: f32[2,1,128], index: 3, kind: output, shape index: {1}]
  %4 = xla_tuple %s2, %s3
  %s5 = sld [smem:[#allocation0]]
  $region49: #{tpu_custom_call.1} parent=0
    _
  %s7 = ssub.s32 1, %s5
  %s8 = scalar_select 0, %s7, %s5
  $region1: #{tpu_custom_call.1} parent=0
    #allocation3 [shape = 'u8[1024]{0}', space=vmem, size = 0x400, scoped, tag = 'output window, operand 0']
    #allocation4 [shape = 's32[2]{0}', space=sflag, size = 0x8, scoped, tag = 'scoped memory for tpu_custom_call.1']
    #allocation5 [shape = 'u8[1024]{0}', space=vmem, size = 0x400, scoped, tag = 'output window, operand 1']
    #allocation6 [shape = 's32[2]{0}', space=sflag, size = 0x8, scoped, tag = 'scoped memory for tpu_custom_call.1']
    %9 = vsyncpa [#allocation4], 0
    %s10 = scalar_lea.sflag [#allocation4], 1
    %11 = vsyncpa %s10, 0
    %12 = vsyncpa [#allocation6], 0
    %s13 = scalar_lea.sflag [#allocation6], 1
    %14 = vsyncpa %s13, 0
    loop: start=0, step=1, limit=4
    $region2: #{tpu_custom_call.1} parent=1 // loop_pre_header
      _
    $region3: #{tpu_custom_call.1} parent=1 // loop_header
      %s16 = sphi 0, %s20
      %p17 = scmp.ge.s32.totalorder %s16, 4
      %s26 = sphi 0, %s28
      %s29 = sphi 0, %s26
      %s30 = sphi 0, %s29
      %s46 = sphi 0, %s30
      %s50 = sphi 0, %s50
      %s52 = sphi 0, %s50
      %s53 = sphi 0, %s52
      %s67 = sphi 0, %s53
      %s73 = sphi 0, %s75
      %s76 = sphi 0, %s73
      %s77 = sphi 0, %s76
      %s93 = sphi 0, %s77
      %s99 = sphi 0, %s101
      %s102 = sphi 0, %s99
      %s103 = sphi 0, %s102
      %s119 = sphi 0, %s103
    $region4: #{tpu_custom_call.1} parent=1 // loop_header_branch
      %19 = sbr.rel (%p17) target = $region8
    $region5: #{tpu_custom_call.1} parent=1 // loop_body
      %s21 = ssub.s32 %s16, 1
      %s22 = ssub.s32 %s16, 2
      %s23 = sadd.s32 %s16, 1
      %s24 = ssub.s32 %s16, %s23
      %p25 = scmp.eq.s32.totalorder %s24, 0
      %s27 = sadd.s32 %s26, 1
      %s28 = scalar_select %p25, %s26, %s27
      %p31 = pneg %p25
      %p32 = scmp.eq.s32.totalorder %s16, 1
      %p33 = por %p31, %p32
      %p34 = scmp.ne.s32.totalorder %s26, %s29
      %p35 = scmp.eq.s32.totalorder %s16, 0
      %p36 = por %p34, %p35
      %p37 = scmp.ne.s32.totalorder %s26, %s29
      %p38 = scmp.eq.s32.totalorder %s21, 1
      %p39 = por %p37, %p38
      %p40 = scmp.ne.s32.totalorder %s29, %s30
      %p41 = scmp.eq.s32.totalorder %s21, 0
      %p42 = por %p40, %p41
      %p43 = scmp.ne.s32.totalorder %s29, %s30
      %p44 = scmp.eq.s32.totalorder %s22, 1
      %p45 = por %p43, %p44
      %p47 = scmp.ne.s32.totalorder %s30, %s46
      %p48 = scmp.eq.s32.totalorder %s22, 0
      %p49 = por %p47, %p48
      %s51 = sadd.s32 %s50, 1
      %p54 = scmp.eq.s32.totalorder %s16, 1
      %p55 = scmp.ne.s32.totalorder %s50, %s52
      %p56 = scmp.eq.s32.totalorder %s16, 0
      %p57 = por %p55, %p56
      %p58 = scmp.ne.s32.totalorder %s50, %s52
      %p59 = scmp.eq.s32.totalorder %s21, 1
      %p60 = por %p58, %p59
      %p61 = scmp.ne.s32.totalorder %s52, %s53
      %p62 = scmp.eq.s32.totalorder %s21, 0
      %p63 = por %p61, %p62
      %p64 = scmp.ne.s32.totalorder %s52, %s53
      %p65 = scmp.eq.s32.totalorder %s22, 1
      %p66 = por %p64, %p65
      %p68 = scmp.ne.s32.totalorder %s53, %s67
      %p69 = scmp.eq.s32.totalorder %s22, 0
      %p70 = por %p68, %p69
      %s71 = ssub.s32 %s16, %s23
      %p72 = scmp.eq.s32.totalorder %s71, 0
      %s74 = sadd.s32 %s73, 1
      %s75 = scalar_select %p72, %s73, %s74
      %p78 = pneg %p72
      %p79 = scmp.eq.s32.totalorder %s16, 1
      %p80 = por %p78, %p79
      %p81 = scmp.ne.s32.totalorder %s73, %s76
      %p82 = scmp.eq.s32.totalorder %s16, 0
      %p83 = por %p81, %p82
      %p84 = scmp.ne.s32.totalorder %s73, %s76
      %p85 = scmp.eq.s32.totalorder %s21, 1
      %p86 = por %p84, %p85
      %p87 = scmp.ne.s32.totalorder %s76, %s77
      %p88 = scmp.eq.s32.totalorder %s21, 0
      %p89 = por %p87, %p88
      %p90 = scmp.ne.s32.totalorder %s76, %s77
      %p91 = scmp.eq.s32.totalorder %s22, 1
      %p92 = por %p90, %p91
      %p94 = scmp.ne.s32.totalorder %s77, %s93
      %p95 = scmp.eq.s32.totalorder %s22, 0
      %p96 = por %p94, %p95
      %s97 = ssub.s32 %s16, %s23
      %p98 = scmp.eq.s32.totalorder %s97, 0
      %s100 = sadd.s32 %s99, 1
      %s101 = scalar_select %p98, %s99, %s100
      %p104 = pneg %p98
      %p105 = scmp.eq.s32.totalorder %s16, 1
      %p106 = por %p104, %p105
      %p107 = scmp.ne.s32.totalorder %s99, %s102
      %p108 = scmp.eq.s32.totalorder %s16, 0
      %p109 = por %p107, %p108
      %p110 = scmp.ne.s32.totalorder %s99, %s102
      %p111 = scmp.eq.s32.totalorder %s21, 1
      %p112 = por %p110, %p111
      %p113 = scmp.ne.s32.totalorder %s102, %s103
      %p114 = scmp.eq.s32.totalorder %s21, 0
      %p115 = por %p113, %p114
      %p116 = scmp.ne.s32.totalorder %s102, %s103
      %p117 = scmp.eq.s32.totalorder %s22, 1
      %p118 = por %p116, %p117
      %p120 = scmp.ne.s32.totalorder %s103, %s119
      %p121 = scmp.eq.s32.totalorder %s22, 0
      %p122 = por %p120, %p121
      %p123 = scmp.le.s32.totalorder 1, %s16
      %p124 = scmp.lt.s32.totalorder %s16, 3
      %p125 = pnand %p123, %p124
      %p126 = pneg %p125
      // Predicated region
      $region9: #{tpu_custom_call.1} parent=5 // pred_check
        _
      $region10: #{tpu_custom_call.1} parent=5 // pred_check_branch
        %128 = sbr.rel (%p125) target = $region12
      $region11: #{tpu_custom_call.1} parent=5 // pred_region
        %s129 = ssub.s32 %s16, 1
        // Predicated region
        $region13: #{tpu_custom_call.1} parent=11 // pred_check
          %p130 = pneg %p63
        $region14: #{tpu_custom_call.1} parent=11 // pred_check_branch
          %132 = sbr.rel (%p130) target = $region16
        $region15: #{tpu_custom_call.1} parent=11 // pred_region
          _
        $region16: #{tpu_custom_call.1} parent=11 // pred_fallthru
          _
      $region12: #{tpu_custom_call.1} parent=5 // pred_fallthru
        _
      %p133 = scmp.lt.s32.totalorder %s16, 2
      // Predicated region
      $region17: #{tpu_custom_call.1} parent=5 // pred_check
        %p134 = pneg %p133
      $region18: #{tpu_custom_call.1} parent=5 // pred_check_branch
        %136 = sbr.rel (%p134) target = $region20
      $region19: #{tpu_custom_call.1} parent=5 // pred_region
        // Predicated region
        $region21: #{tpu_custom_call.1} parent=19 // pred_check
          %p137 = pneg %p36
        $region22: #{tpu_custom_call.1} parent=19 // pred_check_branch
          %139 = sbr.rel (%p137) target = $region24
        $region23: #{tpu_custom_call.1} parent=19 // pred_region
          %p140 = scmp.lt.s32.totalorder %s16, 1
          %s141 = scalar_select %p140, %s16, 1
          %s142 = smul.addr %s141, 32
          %s143 = smul.addr %s142, 8
          %s144 = scalar_lea.vmem %s0, %s143
        $region24: #{tpu_custom_call.1} parent=19 // pred_fallthru
          _
      $region20: #{tpu_custom_call.1} parent=5 // pred_fallthru
        _
      %p145 = scmp.le.s32.totalorder 1, %s16
      %p146 = scmp.lt.s32.totalorder %s16, 3
      %p147 = pnand %p145, %p146
      %p148 = pneg %p147
      // Predicated region
      $region25: #{tpu_custom_call.1} parent=5 // pred_check
        _
      $region26: #{tpu_custom_call.1} parent=5 // pred_check_branch
        %150 = sbr.rel (%p147) target = $region28
      $region27: #{tpu_custom_call.1} parent=5 // pred_region
        %s151 = ssub.s32 %s16, 1
        %p152 = scmp.lt.s32.totalorder %s21, 1
        %s153 = scalar_select %p152, %s21, 1
        %s154 = smul.addr %s153, 32
        %s155 = smul.addr %s154, 8
        %s156 = scalar_lea.vmem %s0, %s155
        %p157 = pneg %p42
        %p158 = pneg %p39
        %p159 = pneg %p63
        %p160 = pneg %p60
        %p161 = pneg %p89
        %p162 = pneg %p86
        %s163 = sand.u32 %s76, 1
        %s164 = scalar_lea.sflag [#allocation4], %s163
        %s165 = sand.u32 %s76, 1
        %s166 = scalar_lea.vmem [#allocation3], %s165
        %p167 = pneg %p115
        %p168 = pneg %p112
        %s169 = sand.u32 %s102, 1
        %s170 = scalar_lea.sflag [#allocation6], %s169
        %s171 = sand.u32 %s102, 1
        %s172 = scalar_lea.vmem [#allocation5], %s171
        %p173 = scmp.lt.s32.totalorder %s21, 1
        %s174 = scalar_select %p173, %s21, 1
        %s175 = smul.addr %s174, 32
        %s176 = smul.addr %s175, 8
        %s177 = scalar_lea.vmem %s0, %s176
        %179 = vst [vmem:[#allocation2] sm:$0xff] 0.0
        %180 = vst [vmem:[#allocation2 + $0x8] sm:$0xff] 0.0
        %181 = vst [vmem:[#allocation2 + $0x10] sm:$0xff] 0.0
        %182 = vst [vmem:[#allocation2 + $0x18] sm:$0xff] 0.0
        %183 = vst [vmem:[#allocation2 + $0x20] sm:$0xff] 0.0
        %184 = vst [vmem:[#allocation2 + $0x28] sm:$0xff] 0.0
        %185 = vst [vmem:[#allocation2 + $0x30] sm:$0xff] 0.0
        %186 = vst [vmem:[#allocation2 + $0x38] sm:$0xff] 0.0
        %187 = vst [vmem:[#allocation2 + $0x40] sm:$0xff] 0.0
        %188 = vst [vmem:[#allocation2 + $0x48] sm:$0xff] 0.0
        %189 = vst [vmem:[#allocation2 + $0x50] sm:$0xff] 0.0
        %190 = vst [vmem:[#allocation2 + $0x58] sm:$0xff] 0.0
        %191 = vst [vmem:[#allocation2 + $0x60] sm:$0xff] 0.0
        %192 = vst [vmem:[#allocation2 + $0x68] sm:$0xff] 0.0
        %193 = vst [vmem:[#allocation2 + $0x70] sm:$0xff] 0.0
        %194 = vst [vmem:[#allocation2 + $0x78] sm:$0xff] 0.0
        %195 = vst [vmem:[#allocation2 + $0x80] sm:$0xff] 0.0
        %196 = vst [vmem:[#allocation2 + $0x88] sm:$0xff] 0.0
        %197 = vst [vmem:[#allocation2 + $0x90] sm:$0xff] 0.0
        %198 = vst [vmem:[#allocation2 + $0x98] sm:$0xff] 0.0
        %199 = vst [vmem:[#allocation2 + $0xa0] sm:$0xff] 0.0
        %200 = vst [vmem:[#allocation2 + $0xa8] sm:$0xff] 0.0
        %201 = vst [vmem:[#allocation2 + $0xb0] sm:$0xff] 0.0
        %202 = vst [vmem:[#allocation2 + $0xb8] sm:$0xff] 0.0
        %203 = vst [vmem:[#allocation2 + $0xc0] sm:$0xff] 0.0
        %204 = vst [vmem:[#allocation2 + $0xc8] sm:$0xff] 0.0
        %205 = vst [vmem:[#allocation2 + $0xd0] sm:$0xff] 0.0
        %206 = vst [vmem:[#allocation2 + $0xd8] sm:$0xff] 0.0
        %207 = vst [vmem:[#allocation2 + $0xe0] sm:$0xff] 0.0
        %208 = vst [vmem:[#allocation2 + $0xe8] sm:$0xff] 0.0
        %209 = vst [vmem:[#allocation2 + $0xf0] sm:$0xff] 0.0
        %210 = vst [vmem:[#allocation2 + $0xf8] sm:$0xff] 0.0
        %v211 = vld [vmem:[%s177] sm:$0xff]
        %v212 = vld [vmem:[%s177 + $0x8] sm:$0x7f]
        %v213 = vld [vmem:[%s177 + $0x10] sm:$0xff]
        %v214 = vld [vmem:[%s177 + $0x18] sm:$0x7f]
        %v215 = vld [vmem:[%s177 + $0x20] sm:$0xff]
        %v216 = vld [vmem:[%s177 + $0x28] sm:$0x7f]
        %v217 = vld [vmem:[%s177 + $0x30] sm:$0xff]
        %v218 = vld [vmem:[%s177 + $0x38] sm:$0x7f]
        %v219 = vld [vmem:[%s177 + $0x40] sm:$0xff]
        %v220 = vld [vmem:[%s177 + $0x48] sm:$0x7f]
        %v221 = vld [vmem:[%s177 + $0x50] sm:$0xff]
        %v222 = vld [vmem:[%s177 + $0x58] sm:$0x7f]
        %v223 = vld [vmem:[%s177 + $0x60] sm:$0xff]
        %v224 = vld [vmem:[%s177 + $0x68] sm:$0x7f]
        %v225 = vld [vmem:[%s177 + $0x70] sm:$0xff]
        %v226 = vld [vmem:[%s177 + $0x78] sm:$0x7f]
        %v227 = vld [vmem:[%s177 + $0x80] sm:$0xff]
        %v228 = vld [vmem:[%s177 + $0x88] sm:$0x7f]
        %v229 = vld [vmem:[%s177 + $0x90] sm:$0xff]
        %v230 = vld [vmem:[%s177 + $0x98] sm:$0x7f]
        %v231 = vld [vmem:[%s177 + $0xa0] sm:$0xff]
        %v232 = vld [vmem:[%s177 + $0xa8] sm:$0x7f]
        %v233 = vld [vmem:[%s177 + $0xb0] sm:$0xff]
        %v234 = vld [vmem:[%s177 + $0xb8] sm:$0x7f]
        %v235 = vld [vmem:[%s177 + $0xc0] sm:$0xff]
        %v236 = vld [vmem:[%s177 + $0xc8] sm:$0x7f]
        %v237 = vld [vmem:[%s177 + $0xd0] sm:$0xff]
        %v238 = vld [vmem:[%s177 + $0xd8] sm:$0x7f]
        %v239 = vld [vmem:[%s177 + $0xe0] sm:$0xff]
        %v240 = vld [vmem:[%s177 + $0xe8] sm:$0x7f]
        %s241 = scalar_lea.vmem [#allocation2], 16
        %vm242 = vcmask 31744
        %243 = vst.msk [vmem:[%s241 + $0x1] sm:$0xff] %vm242, %v211
        %vm244 = vcmask 30720
        %245 = vst.msk [vmem:[%s241 + $0x9] sm:$0x7f] %vm244, %v212
        %246 = vst.msk [vmem:[%s241 + $0x11] sm:$0xff] %vm242, %v213
        %247 = vst.msk [vmem:[%s241 + $0x19] sm:$0x7f] %vm244, %v214
        %248 = vst.msk [vmem:[%s241 + $0x21] sm:$0xff] %vm242, %v215
        %249 = vst.msk [vmem:[%s241 + $0x29] sm:$0x7f] %vm244, %v216
        %250 = vst.msk [vmem:[%s241 + $0x31] sm:$0xff] %vm242, %v217
        %251 = vst.msk [vmem:[%s241 + $0x39] sm:$0x7f] %vm244, %v218
        %252 = vst.msk [vmem:[%s241 + $0x41] sm:$0xff] %vm242, %v219
        %253 = vst.msk [vmem:[%s241 + $0x49] sm:$0x7f] %vm244, %v220
        %254 = vst.msk [vmem:[%s241 + $0x51] sm:$0xff] %vm242, %v221
        %255 = vst.msk [vmem:[%s241 + $0x59] sm:$0x7f] %vm244, %v222
        %256 = vst.msk [vmem:[%s241 + $0x61] sm:$0xff] %vm242, %v223
        %257 = vst.msk [vmem:[%s241 + $0x69] sm:$0x7f] %vm244, %v224
        %258 = vst.msk [vmem:[%s241 + $0x71] sm:$0xff] %vm242, %v225
        %259 = vst.msk [vmem:[%s241 + $0x79] sm:$0x7f] %vm244, %v226
        %260 = vst.msk [vmem:[%s241 + $0x81] sm:$0xff] %vm242, %v227
        %261 = vst.msk [vmem:[%s241 + $0x89] sm:$0x7f] %vm244, %v228
        %262 = vst.msk [vmem:[%s241 + $0x91] sm:$0xff] %vm242, %v229
        %263 = vst.msk [vmem:[%s241 + $0x99] sm:$0x7f] %vm244, %v230
        %264 = vst.msk [vmem:[%s241 + $0xa1] sm:$0xff] %vm242, %v231
        %265 = vst.msk [vmem:[%s241 + $0xa9] sm:$0x7f] %vm244, %v232
        %266 = vst.msk [vmem:[%s241 + $0xb1] sm:$0xff] %vm242, %v233
        %267 = vst.msk [vmem:[%s241 + $0xb9] sm:$0x7f] %vm244, %v234
        %268 = vst.msk [vmem:[%s241 + $0xc1] sm:$0xff] %vm242, %v235
        %269 = vst.msk [vmem:[%s241 + $0xc9] sm:$0x7f] %vm244, %v236
        %270 = vst.msk [vmem:[%s241 + $0xd1] sm:$0xff] %vm242, %v237
        %271 = vst.msk [vmem:[%s241 + $0xd9] sm:$0x7f] %vm244, %v238
        %272 = vst.msk [vmem:[%s241 + $0xe1] sm:$0xff] %vm242, %v239
        %273 = vst.msk [vmem:[%s241 + $0xe9] sm:$0x7f] %vm244, %v240
        %v274 = vld [vmem:[%s177] sm:$0xff]
        %v275 = vld [vmem:[%s177 + $0x8] sm:$0xff]
        %v276 = vld [vmem:[%s177 + $0x10] sm:$0xff]
        %v277 = vld [vmem:[%s177 + $0x18] sm:$0xff]
        %v278 = vld [vmem:[%s177 + $0x20] sm:$0xff]
        %v279 = vld [vmem:[%s177 + $0x28] sm:$0xff]
        %v280 = vld [vmem:[%s177 + $0x30] sm:$0xff]
        %v281 = vld [vmem:[%s177 + $0x38] sm:$0xff]
        %v282 = vld [vmem:[%s177 + $0x40] sm:$0xff]
        %v283 = vld [vmem:[%s177 + $0x48] sm:$0xff]
        %v284 = vld [vmem:[%s177 + $0x50] sm:$0xff]
        %v285 = vld [vmem:[%s177 + $0x58] sm:$0xff]
        %v286 = vld [vmem:[%s177 + $0x60] sm:$0xff]
        %v287 = vld [vmem:[%s177 + $0x68] sm:$0xff]
        %v288 = vld [vmem:[%s177 + $0x70] sm:$0xff]
        %v289 = vld [vmem:[%s177 + $0x78] sm:$0xff]
        %v290 = vld [vmem:[%s177 + $0x80] sm:$0xff]
        %v291 = vld [vmem:[%s177 + $0x88] sm:$0xff]
        %v292 = vld [vmem:[%s177 + $0x90] sm:$0xff]
        %v293 = vld [vmem:[%s177 + $0x98] sm:$0xff]
        %v294 = vld [vmem:[%s177 + $0xa0] sm:$0xff]
        %v295 = vld [vmem:[%s177 + $0xa8] sm:$0xff]
        %v296 = vld [vmem:[%s177 + $0xb0] sm:$0xff]
        %v297 = vld [vmem:[%s177 + $0xb8] sm:$0xff]
        %v298 = vld [vmem:[%s177 + $0xc0] sm:$0xff]
        %v299 = vld [vmem:[%s177 + $0xc8] sm:$0xff]
        %v300 = vld [vmem:[%s177 + $0xd0] sm:$0xff]
        %v301 = vld [vmem:[%s177 + $0xd8] sm:$0xff]
        %v302 = vld [vmem:[%s177 + $0xe0] sm:$0xff]
        %v303 = vld [vmem:[%s177 + $0xe8] sm:$0xff]
        %334 = vrot.lane.b32.xlu0 %v274, 4
        %v335 = vpop.permute.xlu0 %334
        %336 = vrot.lane.b32.xlu0 %v275, 4
        %v337 = vpop.permute.xlu0 %336
        %338 = vrot.lane.b32.xlu0 %v276, 4
        %v339 = vpop.permute.xlu0 %338
        %340 = vrot.lane.b32.xlu0 %v277, 4
        %v341 = vpop.permute.xlu0 %340
        %342 = vrot.lane.b32.xlu0 %v278, 4
        %v343 = vpop.permute.xlu0 %342
        %344 = vrot.lane.b32.xlu0 %v279, 4
        %v345 = vpop.permute.xlu0 %344
        %346 = vrot.lane.b32.xlu0 %v280, 4
        %v347 = vpop.permute.xlu0 %346
        %348 = vrot.lane.b32.xlu0 %v281, 4
        %v349 = vpop.permute.xlu0 %348
        %350 = vrot.lane.b32.xlu0 %v282, 4
        %v351 = vpop.permute.xlu0 %350
        %352 = vrot.lane.b32.xlu0 %v283, 4
        %v353 = vpop.permute.xlu0 %352
        %354 = vrot.lane.b32.xlu0 %v284, 4
        %v355 = vpop.permute.xlu0 %354
        %356 = vrot.lane.b32.xlu0 %v285, 4
        %v357 = vpop.permute.xlu0 %356
        %358 = vrot.lane.b32.xlu0 %v286, 4
        %v359 = vpop.permute.xlu0 %358
        %360 = vrot.lane.b32.xlu0 %v287, 4
        %v361 = vpop.permute.xlu0 %360
        %362 = vrot.lane.b32.xlu0 %v288, 4
        %v363 = vpop.permute.xlu0 %362
        %364 = vrot.lane.b32.xlu0 %v289, 4
        %v365 = vpop.permute.xlu0 %364
        %366 = vrot.lane.b32.xlu0 %v290, 4
        %v367 = vpop.permute.xlu0 %366
        %368 = vrot.lane.b32.xlu0 %v291, 4
        %v369 = vpop.permute.xlu0 %368
        %370 = vrot.lane.b32.xlu0 %v292, 4
        %v371 = vpop.permute.xlu0 %370
        %372 = vrot.lane.b32.xlu0 %v293, 4
        %v373 = vpop.permute.xlu0 %372
        %374 = vrot.lane.b32.xlu0 %v294, 4
        %v375 = vpop.permute.xlu0 %374
        %376 = vrot.lane.b32.xlu0 %v295, 4
        %v377 = vpop.permute.xlu0 %376
        %378 = vrot.lane.b32.xlu0 %v296, 4
        %v379 = vpop.permute.xlu0 %378
        %380 = vrot.lane.b32.xlu0 %v297, 4
        %v381 = vpop.permute.xlu0 %380
        %382 = vrot.lane.b32.xlu0 %v298, 4
        %v383 = vpop.permute.xlu0 %382
        %384 = vrot.lane.b32.xlu0 %v299, 4
        %v385 = vpop.permute.xlu0 %384
        %386 = vrot.lane.b32.xlu0 %v300, 4
        %v387 = vpop.permute.xlu0 %386
        %388 = vrot.lane.b32.xlu0 %v301, 4
        %v389 = vpop.permute.xlu0 %388
        %390 = vrot.lane.b32.xlu0 %v302, 4
        %v391 = vpop.permute.xlu0 %390
        %392 = vrot.lane.b32.xlu0 %v303, 4
        %v393 = vpop.permute.xlu0 %392
        %vm424 = vcmask 64544
        %425 = vst.msk [vmem:[%s241] sm:$0xff] %vm424, %v335
        %426 = vst.msk [vmem:[%s241 + $0x8] sm:$0xff] %vm424, %v337
        %427 = vst.msk [vmem:[%s241 + $0x10] sm:$0xff] %vm424, %v339
        %428 = vst.msk [vmem:[%s241 + $0x18] sm:$0xff] %vm424, %v341
        %429 = vst.msk [vmem:[%s241 + $0x20] sm:$0xff] %vm424, %v343
        %430 = vst.msk [vmem:[%s241 + $0x28] sm:$0xff] %vm424, %v345
        %431 = vst.msk [vmem:[%s241 + $0x30] sm:$0xff] %vm424, %v347
        %432 = vst.msk [vmem:[%s241 + $0x38] sm:$0xff] %vm424, %v349
        %433 = vst.msk [vmem:[%s241 + $0x40] sm:$0xff] %vm424, %v351
        %434 = vst.msk [vmem:[%s241 + $0x48] sm:$0xff] %vm424, %v353
        %435 = vst.msk [vmem:[%s241 + $0x50] sm:$0xff] %vm424, %v355
        %436 = vst.msk [vmem:[%s241 + $0x58] sm:$0xff] %vm424, %v357
        %437 = vst.msk [vmem:[%s241 + $0x60] sm:$0xff] %vm424, %v359
        %438 = vst.msk [vmem:[%s241 + $0x68] sm:$0xff] %vm424, %v361
        %439 = vst.msk [vmem:[%s241 + $0x70] sm:$0xff] %vm424, %v363
        %440 = vst.msk [vmem:[%s241 + $0x78] sm:$0xff] %vm424, %v365
        %441 = vst.msk [vmem:[%s241 + $0x80] sm:$0xff] %vm424, %v367
        %442 = vst.msk [vmem:[%s241 + $0x88] sm:$0xff] %vm424, %v369
        %443 = vst.msk [vmem:[%s241 + $0x90] sm:$0xff] %vm424, %v371
        %444 = vst.msk [vmem:[%s241 + $0x98] sm:$0xff] %vm424, %v373
        %445 = vst.msk [vmem:[%s241 + $0xa0] sm:$0xff] %vm424, %v375
        %446 = vst.msk [vmem:[%s241 + $0xa8] sm:$0xff] %vm424, %v377
        %447 = vst.msk [vmem:[%s241 + $0xb0] sm:$0xff] %vm424, %v379
        %448 = vst.msk [vmem:[%s241 + $0xb8] sm:$0xff] %vm424, %v381
        %449 = vst.msk [vmem:[%s241 + $0xc0] sm:$0xff] %vm424, %v383
        %450 = vst.msk [vmem:[%s241 + $0xc8] sm:$0xff] %vm424, %v385
        %451 = vst.msk [vmem:[%s241 + $0xd0] sm:$0xff] %vm424, %v387
        %452 = vst.msk [vmem:[%s241 + $0xd8] sm:$0xff] %vm424, %v389
        %453 = vst.msk [vmem:[%s241 + $0xe0] sm:$0xff] %vm424, %v391
        %454 = vst.msk [vmem:[%s241 + $0xe8] sm:$0xff] %vm424, %v393
        %v455 = vld [vmem:[%s177 + $0x1] sm:$0xff]
        %v456 = vld [vmem:[%s177 + $0x9] sm:$0x7f]
        %v457 = vld [vmem:[%s177 + $0x11] sm:$0xff]
        %v458 = vld [vmem:[%s177 + $0x19] sm:$0x7f]
        %v459 = vld [vmem:[%s177 + $0x21] sm:$0xff]
        %v460 = vld [vmem:[%s177 + $0x29] sm:$0x7f]
        %v461 = vld [vmem:[%s177 + $0x31] sm:$0xff]
        %v462 = vld [vmem:[%s177 + $0x39] sm:$0x7f]
        %v463 = vld [vmem:[%s177 + $0x41] sm:$0xff]
        %v464 = vld [vmem:[%s177 + $0x49] sm:$0x7f]
        %v465 = vld [vmem:[%s177 + $0x51] sm:$0xff]
        %v466 = vld [vmem:[%s177 + $0x59] sm:$0x7f]
        %v467 = vld [vmem:[%s177 + $0x61] sm:$0xff]
        %v468 = vld [vmem:[%s177 + $0x69] sm:$0x7f]
        %v469 = vld [vmem:[%s177 + $0x71] sm:$0xff]
        %v470 = vld [vmem:[%s177 + $0x79] sm:$0x7f]
        %v471 = vld [vmem:[%s177 + $0x81] sm:$0xff]
        %v472 = vld [vmem:[%s177 + $0x89] sm:$0x7f]
        %v473 = vld [vmem:[%s177 + $0x91] sm:$0xff]
        %v474 = vld [vmem:[%s177 + $0x99] sm:$0x7f]
        %v475 = vld [vmem:[%s177 + $0xa1] sm:$0xff]
        %v476 = vld [vmem:[%s177 + $0xa9] sm:$0x7f]
        %v477 = vld [vmem:[%s177 + $0xb1] sm:$0xff]
        %v478 = vld [vmem:[%s177 + $0xb9] sm:$0x7f]
        %v479 = vld [vmem:[%s177 + $0xc1] sm:$0xff]
        %v480 = vld [vmem:[%s177 + $0xc9] sm:$0x7f]
        %v481 = vld [vmem:[%s177 + $0xd1] sm:$0xff]
        %v482 = vld [vmem:[%s177 + $0xd9] sm:$0x7f]
        %v483 = vld [vmem:[%s177 + $0xe1] sm:$0xff]
        %v484 = vld [vmem:[%s177 + $0xe9] sm:$0x7f]
        %515 = vrot.lane.b32.xlu0 %v455, 8
        %v516 = vpop.permute.xlu0 %515
        %517 = vrot.lane.b32.xlu0 %v456, 8
        %v518 = vpop.permute.xlu0 %517
        %519 = vrot.lane.b32.xlu0 %v457, 8
        %v520 = vpop.permute.xlu0 %519
        %521 = vrot.lane.b32.xlu0 %v458, 8
        %v522 = vpop.permute.xlu0 %521
        %523 = vrot.lane.b32.xlu0 %v459, 8
        %v524 = vpop.permute.xlu0 %523
        %525 = vrot.lane.b32.xlu0 %v460, 8
        %v526 = vpop.permute.xlu0 %525
        %527 = vrot.lane.b32.xlu0 %v461, 8
        %v528 = vpop.permute.xlu0 %527
        %529 = vrot.lane.b32.xlu0 %v462, 8
        %v530 = vpop.permute.xlu0 %529
        %531 = vrot.lane.b32.xlu0 %v463, 8
        %v532 = vpop.permute.xlu0 %531
        %533 = vrot.lane.b32.xlu0 %v464, 8
        %v534 = vpop.permute.xlu0 %533
        %535 = vrot.lane.b32.xlu0 %v465, 8
        %v536 = vpop.permute.xlu0 %535
        %537 = vrot.lane.b32.xlu0 %v466, 8
        %v538 = vpop.permute.xlu0 %537
        %539 = vrot.lane.b32.xlu0 %v467, 8
        %v540 = vpop.permute.xlu0 %539
        %541 = vrot.lane.b32.xlu0 %v468, 8
        %v542 = vpop.permute.xlu0 %541
        %543 = vrot.lane.b32.xlu0 %v469, 8
        %v544 = vpop.permute.xlu0 %543
        %545 = vrot.lane.b32.xlu0 %v470, 8
        %v546 = vpop.permute.xlu0 %545
        %547 = vrot.lane.b32.xlu0 %v471, 8
        %v548 = vpop.permute.xlu0 %547
        %549 = vrot.lane.b32.xlu0 %v472, 8
        %v550 = vpop.permute.xlu0 %549
        %551 = vrot.lane.b32.xlu0 %v473, 8
        %v552 = vpop.permute.xlu0 %551
        %553 = vrot.lane.b32.xlu0 %v474, 8
        %v554 = vpop.permute.xlu0 %553
        %555 = vrot.lane.b32.xlu0 %v475, 8
        %v556 = vpop.permute.xlu0 %555
        %557 = vrot.lane.b32.xlu0 %v476, 8
        %v558 = vpop.permute.xlu0 %557
        %559 = vrot.lane.b32.xlu0 %v477, 8
        %v560 = vpop.permute.xlu0 %559
        %561 = vrot.lane.b32.xlu0 %v478, 8
        %v562 = vpop.permute.xlu0 %561
        %563 = vrot.lane.b32.xlu0 %v479, 8
        %v564 = vpop.permute.xlu0 %563
        %565 = vrot.lane.b32.xlu0 %v480, 8
        %v566 = vpop.permute.xlu0 %565
        %567 = vrot.lane.b32.xlu0 %v481, 8
        %v568 = vpop.permute.xlu0 %567
        %569 = vrot.lane.b32.xlu0 %v482, 8
        %v570 = vpop.permute.xlu0 %569
        %571 = vrot.lane.b32.xlu0 %v483, 8
        %v572 = vpop.permute.xlu0 %571
        %573 = vrot.lane.b32.xlu0 %v484, 8
        %v574 = vpop.permute.xlu0 %573
        %vm605 = vcmask 97344
        %606 = vst.msk [vmem:[%s241] sm:$0xff] %vm605, %v516
        %vm607 = vcmask 96320
        %608 = vst.msk [vmem:[%s241 + $0x8] sm:$0x7f] %vm607, %v518
        %609 = vst.msk [vmem:[%s241 + $0x10] sm:$0xff] %vm605, %v520
        %610 = vst.msk [vmem:[%s241 + $0x18] sm:$0x7f] %vm607, %v522
        %611 = vst.msk [vmem:[%s241 + $0x20] sm:$0xff] %vm605, %v524
        %612 = vst.msk [vmem:[%s241 + $0x28] sm:$0x7f] %vm607, %v526
        %613 = vst.msk [vmem:[%s241 + $0x30] sm:$0xff] %vm605, %v528
        %614 = vst.msk [vmem:[%s241 + $0x38] sm:$0x7f] %vm607, %v530
        %615 = vst.msk [vmem:[%s241 + $0x40] sm:$0xff] %vm605, %v532
        %616 = vst.msk [vmem:[%s241 + $0x48] sm:$0x7f] %vm607, %v534
        %617 = vst.msk [vmem:[%s241 + $0x50] sm:$0xff] %vm605, %v536
        %618 = vst.msk [vmem:[%s241 + $0x58] sm:$0x7f] %vm607, %v538
        %619 = vst.msk [vmem:[%s241 + $0x60] sm:$0xff] %vm605, %v540
        %620 = vst.msk [vmem:[%s241 + $0x68] sm:$0x7f] %vm607, %v542
        %621 = vst.msk [vmem:[%s241 + $0x70] sm:$0xff] %vm605, %v544
        %622 = vst.msk [vmem:[%s241 + $0x78] sm:$0x7f] %vm607, %v546
        %623 = vst.msk [vmem:[%s241 + $0x80] sm:$0xff] %vm605, %v548
        %624 = vst.msk [vmem:[%s241 + $0x88] sm:$0x7f] %vm607, %v550
        %625 = vst.msk [vmem:[%s241 + $0x90] sm:$0xff] %vm605, %v552
        %626 = vst.msk [vmem:[%s241 + $0x98] sm:$0x7f] %vm607, %v554
        %627 = vst.msk [vmem:[%s241 + $0xa0] sm:$0xff] %vm605, %v556
        %628 = vst.msk [vmem:[%s241 + $0xa8] sm:$0x7f] %vm607, %v558
        %629 = vst.msk [vmem:[%s241 + $0xb0] sm:$0xff] %vm605, %v560
        %630 = vst.msk [vmem:[%s241 + $0xb8] sm:$0x7f] %vm607, %v562
        %631 = vst.msk [vmem:[%s241 + $0xc0] sm:$0xff] %vm605, %v564
        %632 = vst.msk [vmem:[%s241 + $0xc8] sm:$0x7f] %vm607, %v566
        %633 = vst.msk [vmem:[%s241 + $0xd0] sm:$0xff] %vm605, %v568
        %634 = vst.msk [vmem:[%s241 + $0xd8] sm:$0x7f] %vm607, %v570
        %635 = vst.msk [vmem:[%s241 + $0xe0] sm:$0xff] %vm605, %v572
        %636 = vst.msk [vmem:[%s241 + $0xe8] sm:$0x7f] %vm607, %v574
        %v637 = vld [vmem:[%s177] sm:$0xff]
        %v638 = vld [vmem:[%s177 + $0x8] sm:$0x7f]
        %v639 = vld [vmem:[%s177 + $0x10] sm:$0xff]
        %v640 = vld [vmem:[%s177 + $0x18] sm:$0x7f]
        %v641 = vld [vmem:[%s177 + $0x20] sm:$0xff]
        %v642 = vld [vmem:[%s177 + $0x28] sm:$0x7f]
        %v643 = vld [vmem:[%s177 + $0x30] sm:$0xff]
        %v644 = vld [vmem:[%s177 + $0x38] sm:$0x7f]
        %v645 = vld [vmem:[%s177 + $0x40] sm:$0xff]
        %v646 = vld [vmem:[%s177 + $0x48] sm:$0x7f]
        %v647 = vld [vmem:[%s177 + $0x50] sm:$0xff]
        %v648 = vld [vmem:[%s177 + $0x58] sm:$0x7f]
        %v649 = vld [vmem:[%s177 + $0x60] sm:$0xff]
        %v650 = vld [vmem:[%s177 + $0x68] sm:$0x7f]
        %v651 = vld [vmem:[%s177 + $0x70] sm:$0xff]
        %v652 = vld [vmem:[%s177 + $0x78] sm:$0x7f]
        %v653 = vld [vmem:[%s177 + $0x80] sm:$0xff]
        %v654 = vld [vmem:[%s177 + $0x88] sm:$0x7f]
        %v655 = vld [vmem:[%s177 + $0x90] sm:$0xff]
        %v656 = vld [vmem:[%s177 + $0x98] sm:$0x7f]
        %v657 = vld [vmem:[%s177 + $0xa0] sm:$0xff]
        %v658 = vld [vmem:[%s177 + $0xa8] sm:$0x7f]
        %v659 = vld [vmem:[%s177 + $0xb0] sm:$0xff]
        %v660 = vld [vmem:[%s177 + $0xb8] sm:$0x7f]
        %v661 = vld [vmem:[%s177 + $0xc0] sm:$0xff]
        %v662 = vld [vmem:[%s177 + $0xc8] sm:$0x7f]
        %v663 = vld [vmem:[%s177 + $0xd0] sm:$0xff]
        %v664 = vld [vmem:[%s177 + $0xd8] sm:$0x7f]
        %v665 = vld [vmem:[%s177 + $0xe0] sm:$0xff]
        %v666 = vld [vmem:[%s177 + $0xe8] sm:$0x7f]
        %v667 = vld [vmem:[%s177 + $0xf0] sm:$0xff]
        %v668 = vld [vmem:[%s177 + $0xf8] sm:$0x7f]
        %701 = vrot.lane.b32.xlu0 %v637, 12
        %v702 = vpop.permute.xlu0 %701
        %703 = vrot.lane.b32.xlu0 %v638, 12
        %v704 = vpop.permute.xlu0 %703
        %705 = vrot.lane.b32.xlu0 %v639, 12
        %v706 = vpop.permute.xlu0 %705
        %707 = vrot.lane.b32.xlu0 %v640, 12
        %v708 = vpop.permute.xlu0 %707
        %709 = vrot.lane.b32.xlu0 %v641, 12
        %v710 = vpop.permute.xlu0 %709
        %711 = vrot.lane.b32.xlu0 %v642, 12
        %v712 = vpop.permute.xlu0 %711
        %713 = vrot.lane.b32.xlu0 %v643, 12
        %v714 = vpop.permute.xlu0 %713
        %715 = vrot.lane.b32.xlu0 %v644, 12
        %v716 = vpop.permute.xlu0 %715
        %717 = vrot.lane.b32.xlu0 %v645, 12
        %v718 = vpop.permute.xlu0 %717
        %719 = vrot.lane.b32.xlu0 %v646, 12
        %v720 = vpop.permute.xlu0 %719
        %721 = vrot.lane.b32.xlu0 %v647, 12
        %v722 = vpop.permute.xlu0 %721
        %723 = vrot.lane.b32.xlu0 %v648, 12
        %v724 = vpop.permute.xlu0 %723
        %725 = vrot.lane.b32.xlu0 %v649, 12
        %v726 = vpop.permute.xlu0 %725
        %727 = vrot.lane.b32.xlu0 %v650, 12
        %v728 = vpop.permute.xlu0 %727
        %729 = vrot.lane.b32.xlu0 %v651, 12
        %v730 = vpop.permute.xlu0 %729
        %731 = vrot.lane.b32.xlu0 %v652, 12
        %v732 = vpop.permute.xlu0 %731
        %733 = vrot.lane.b32.xlu0 %v653, 12
        %v734 = vpop.permute.xlu0 %733
        %735 = vrot.lane.b32.xlu0 %v654, 12
        %v736 = vpop.permute.xlu0 %735
        %737 = vrot.lane.b32.xlu0 %v655, 12
        %v738 = vpop.permute.xlu0 %737
        %739 = vrot.lane.b32.xlu0 %v656, 12
        %v740 = vpop.permute.xlu0 %739
        %741 = vrot.lane.b32.xlu0 %v657, 12
        %v742 = vpop.permute.xlu0 %741
        %743 = vrot.lane.b32.xlu0 %v658, 12
        %v744 = vpop.permute.xlu0 %743
        %745 = vrot.lane.b32.xlu0 %v659, 12
        %v746 = vpop.permute.xlu0 %745
        %747 = vrot.lane.b32.xlu0 %v660, 12
        %v748 = vpop.permute.xlu0 %747
        %749 = vrot.lane.b32.xlu0 %v661, 12
        %v750 = vpop.permute.xlu0 %749
        %751 = vrot.lane.b32.xlu0 %v662, 12
        %v752 = vpop.permute.xlu0 %751
        %753 = vrot.lane.b32.xlu0 %v663, 12
        %v754 = vpop.permute.xlu0 %753
        %755 = vrot.lane.b32.xlu0 %v664, 12
        %v756 = vpop.permute.xlu0 %755
        %757 = vrot.lane.b32.xlu0 %v665, 12
        %v758 = vpop.permute.xlu0 %757
        %759 = vrot.lane.b32.xlu0 %v666, 12
        %v760 = vpop.permute.xlu0 %759
        %761 = vrot.lane.b32.xlu0 %v667, 12
        %v762 = vpop.permute.xlu0 %761
        %763 = vrot.lane.b32.xlu0 %v668, 12
        %v764 = vpop.permute.xlu0 %763
        %vm797 = vcmask 130144
        %798 = vst.msk [vmem:[#allocation2 + $0x1] sm:$0xff] %vm797, %v702
        %vm799 = vcmask 129120
        %800 = vst.msk [vmem:[#allocation2 + $0x9] sm:$0x7f] %vm799, %v704
        %801 = vst.msk [vmem:[#allocation2 + $0x11] sm:$0xff] %vm797, %v706
        %802 = vst.msk [vmem:[#allocation2 + $0x19] sm:$0x7f] %vm799, %v708
        %803 = vst.msk [vmem:[#allocation2 + $0x21] sm:$0xff] %vm797, %v710
        %804 = vst.msk [vmem:[#allocation2 + $0x29] sm:$0x7f] %vm799, %v712
        %805 = vst.msk [vmem:[#allocation2 + $0x31] sm:$0xff] %vm797, %v714
        %806 = vst.msk [vmem:[#allocation2 + $0x39] sm:$0x7f] %vm799, %v716
        %807 = vst.msk [vmem:[#allocation2 + $0x41] sm:$0xff] %vm797, %v718
        %808 = vst.msk [vmem:[#allocation2 + $0x49] sm:$0x7f] %vm799, %v720
        %809 = vst.msk [vmem:[#allocation2 + $0x51] sm:$0xff] %vm797, %v722
        %810 = vst.msk [vmem:[#allocation2 + $0x59] sm:$0x7f] %vm799, %v724
        %811 = vst.msk [vmem:[#allocation2 + $0x61] sm:$0xff] %vm797, %v726
        %812 = vst.msk [vmem:[#allocation2 + $0x69] sm:$0x7f] %vm799, %v728
        %813 = vst.msk [vmem:[#allocation2 + $0x71] sm:$0xff] %vm797, %v730
        %814 = vst.msk [vmem:[#allocation2 + $0x79] sm:$0x7f] %vm799, %v732
        %815 = vst.msk [vmem:[#allocation2 + $0x81] sm:$0xff] %vm797, %v734
        %816 = vst.msk [vmem:[#allocation2 + $0x89] sm:$0x7f] %vm799, %v736
        %817 = vst.msk [vmem:[#allocation2 + $0x91] sm:$0xff] %vm797, %v738
        %818 = vst.msk [vmem:[#allocation2 + $0x99] sm:$0x7f] %vm799, %v740
        %819 = vst.msk [vmem:[#allocation2 + $0xa1] sm:$0xff] %vm797, %v742
        %820 = vst.msk [vmem:[#allocation2 + $0xa9] sm:$0x7f] %vm799, %v744
        %821 = vst.msk [vmem:[#allocation2 + $0xb1] sm:$0xff] %vm797, %v746
        %822 = vst.msk [vmem:[#allocation2 + $0xb9] sm:$0x7f] %vm799, %v748
        %823 = vst.msk [vmem:[#allocation2 + $0xc1] sm:$0xff] %vm797, %v750
        %824 = vst.msk [vmem:[#allocation2 + $0xc9] sm:$0x7f] %vm799, %v752
        %825 = vst.msk [vmem:[#allocation2 + $0xd1] sm:$0xff] %vm797, %v754
        %826 = vst.msk [vmem:[#allocation2 + $0xd9] sm:$0x7f] %vm799, %v756
        %827 = vst.msk [vmem:[#allocation2 + $0xe1] sm:$0xff] %vm797, %v758
        %828 = vst.msk [vmem:[#allocation2 + $0xe9] sm:$0x7f] %vm799, %v760
        %829 = vst.msk [vmem:[#allocation2 + $0xf1] sm:$0xff] %vm797, %v762
        %830 = vst.msk [vmem:[#allocation2 + $0xf9] sm:$0x7f] %vm799, %v764
        %v831 = vld [vmem:[%s177] sm:$0xff]
        %v832 = vld [vmem:[%s177 + $0x8] sm:$0xff]
        %v833 = vld [vmem:[%s177 + $0x10] sm:$0xff]
        %v834 = vld [vmem:[%s177 + $0x18] sm:$0xff]
        %v835 = vld [vmem:[%s177 + $0x20] sm:$0xff]
        %v836 = vld [vmem:[%s177 + $0x28] sm:$0xff]
        %v837 = vld [vmem:[%s177 + $0x30] sm:$0xff]
        %v838 = vld [vmem:[%s177 + $0x38] sm:$0xff]
        %v839 = vld [vmem:[%s177 + $0x40] sm:$0xff]
        %v840 = vld [vmem:[%s177 + $0x48] sm:$0xff]
        %v841 = vld [vmem:[%s177 + $0x50] sm:$0xff]
        %v842 = vld [vmem:[%s177 + $0x58] sm:$0xff]
        %v843 = vld [vmem:[%s177 + $0x60] sm:$0xff]
        %v844 = vld [vmem:[%s177 + $0x68] sm:$0xff]
        %v845 = vld [vmem:[%s177 + $0x70] sm:$0xff]
        %v846 = vld [vmem:[%s177 + $0x78] sm:$0xff]
        %v847 = vld [vmem:[%s177 + $0x80] sm:$0xff]
        %v848 = vld [vmem:[%s177 + $0x88] sm:$0xff]
        %v849 = vld [vmem:[%s177 + $0x90] sm:$0xff]
        %v850 = vld [vmem:[%s177 + $0x98] sm:$0xff]
        %v851 = vld [vmem:[%s177 + $0xa0] sm:$0xff]
        %v852 = vld [vmem:[%s177 + $0xa8] sm:$0xff]
        %v853 = vld [vmem:[%s177 + $0xb0] sm:$0xff]
        %v854 = vld [vmem:[%s177 + $0xb8] sm:$0xff]
        %v855 = vld [vmem:[%s177 + $0xc0] sm:$0xff]
        %v856 = vld [vmem:[%s177 + $0xc8] sm:$0xff]
        %v857 = vld [vmem:[%s177 + $0xd0] sm:$0xff]
        %v858 = vld [vmem:[%s177 + $0xd8] sm:$0xff]
        %v859 = vld [vmem:[%s177 + $0xe0] sm:$0xff]
        %v860 = vld [vmem:[%s177 + $0xe8] sm:$0xff]
        %v861 = vld [vmem:[%s177 + $0xf0] sm:$0xff]
        %v862 = vld [vmem:[%s177 + $0xf8] sm:$0xff]
        %895 = vrot.lane.b32.xlu0 %v831, 16
        %v896 = vpop.permute.xlu0 %895
        %897 = vrot.lane.b32.xlu0 %v832, 16
        %v898 = vpop.permute.xlu0 %897
        %899 = vrot.lane.b32.xlu0 %v833, 16
        %v900 = vpop.permute.xlu0 %899
        %901 = vrot.lane.b32.xlu0 %v834, 16
        %v902 = vpop.permute.xlu0 %901
        %903 = vrot.lane.b32.xlu0 %v835, 16
        %v904 = vpop.permute.xlu0 %903
        %905 = vrot.lane.b32.xlu0 %v836, 16
        %v906 = vpop.permute.xlu0 %905
        %907 = vrot.lane.b32.xlu0 %v837, 16
        %v908 = vpop.permute.xlu0 %907
        %909 = vrot.lane.b32.xlu0 %v838, 16
        %v910 = vpop.permute.xlu0 %909
        %911 = vrot.lane.b32.xlu0 %v839, 16
        %v912 = vpop.permute.xlu0 %911
        %913 = vrot.lane.b32.xlu0 %v840, 16
        %v914 = vpop.permute.xlu0 %913
        %915 = vrot.lane.b32.xlu0 %v841, 16
        %v916 = vpop.permute.xlu0 %915
        %917 = vrot.lane.b32.xlu0 %v842, 16
        %v918 = vpop.permute.xlu0 %917
        %919 = vrot.lane.b32.xlu0 %v843, 16
        %v920 = vpop.permute.xlu0 %919
        %921 = vrot.lane.b32.xlu0 %v844, 16
        %v922 = vpop.permute.xlu0 %921
        %923 = vrot.lane.b32.xlu0 %v845, 16
        %v924 = vpop.permute.xlu0 %923
        %925 = vrot.lane.b32.xlu0 %v846, 16
        %v926 = vpop.permute.xlu0 %925
        %927 = vrot.lane.b32.xlu0 %v847, 16
        %v928 = vpop.permute.xlu0 %927
        %929 = vrot.lane.b32.xlu0 %v848, 16
        %v930 = vpop.permute.xlu0 %929
        %931 = vrot.lane.b32.xlu0 %v849, 16
        %v932 = vpop.permute.xlu0 %931
        %933 = vrot.lane.b32.xlu0 %v850, 16
        %v934 = vpop.permute.xlu0 %933
        %935 = vrot.lane.b32.xlu0 %v851, 16
        %v936 = vpop.permute.xlu0 %935
        %937 = vrot.lane.b32.xlu0 %v852, 16
        %v938 = vpop.permute.xlu0 %937
        %939 = vrot.lane.b32.xlu0 %v853, 16
        %v940 = vpop.permute.xlu0 %939
        %941 = vrot.lane.b32.xlu0 %v854, 16
        %v942 = vpop.permute.xlu0 %941
        %943 = vrot.lane.b32.xlu0 %v855, 16
        %v944 = vpop.permute.xlu0 %943
        %945 = vrot.lane.b32.xlu0 %v856, 16
        %v946 = vpop.permute.xlu0 %945
        %947 = vrot.lane.b32.xlu0 %v857, 16
        %v948 = vpop.permute.xlu0 %947
        %949 = vrot.lane.b32.xlu0 %v858, 16
        %v950 = vpop.permute.xlu0 %949
        %951 = vrot.lane.b32.xlu0 %v859, 16
        %v952 = vpop.permute.xlu0 %951
        %953 = vrot.lane.b32.xlu0 %v860, 16
        %v954 = vpop.permute.xlu0 %953
        %955 = vrot.lane.b32.xlu0 %v861, 16
        %v956 = vpop.permute.xlu0 %955
        %957 = vrot.lane.b32.xlu0 %v862, 16
        %v958 = vpop.permute.xlu0 %957
        %vm991 = vcmask 162944
        %992 = vst.msk [vmem:[#allocation2] sm:$0xff] %vm991, %v896
        %993 = vst.msk [vmem:[#allocation2 + $0x8] sm:$0xff] %vm991, %v898
        %994 = vst.msk [vmem:[#allocation2 + $0x10] sm:$0xff] %vm991, %v900
        %995 = vst.msk [vmem:[#allocation2 + $0x18] sm:$0xff] %vm991, %v902
        %996 = vst.msk [vmem:[#allocation2 + $0x20] sm:$0xff] %vm991, %v904
        %997 = vst.msk [vmem:[#allocation2 + $0x28] sm:$0xff] %vm991, %v906
        %998 = vst.msk [vmem:[#allocation2 + $0x30] sm:$0xff] %vm991, %v908
        %999 = vst.msk [vmem:[#allocation2 + $0x38] sm:$0xff] %vm991, %v910
        %1000 = vst.msk [vmem:[#allocation2 + $0x40] sm:$0xff] %vm991, %v912
        %1001 = vst.msk [vmem:[#allocation2 + $0x48] sm:$0xff] %vm991, %v914
        %1002 = vst.msk [vmem:[#allocation2 + $0x50] sm:$0xff] %vm991, %v916
        %1003 = vst.msk [vmem:[#allocation2 + $0x58] sm:$0xff] %vm991, %v918
        %1004 = vst.msk [vmem:[#allocation2 + $0x60] sm:$0xff] %vm991, %v920
        %1005 = vst.msk [vmem:[#allocation2 + $0x68] sm:$0xff] %vm991, %v922
        %1006 = vst.msk [vmem:[#allocation2 + $0x70] sm:$0xff] %vm991, %v924
        %1007 = vst.msk [vmem:[#allocation2 + $0x78] sm:$0xff] %vm991, %v926
        %1008 = vst.msk [vmem:[#allocation2 + $0x80] sm:$0xff] %vm991, %v928
        %1009 = vst.msk [vmem:[#allocation2 + $0x88] sm:$0xff] %vm991, %v930
        %1010 = vst.msk [vmem:[#allocation2 + $0x90] sm:$0xff] %vm991, %v932
        %1011 = vst.msk [vmem:[#allocation2 + $0x98] sm:$0xff] %vm991, %v934
        %1012 = vst.msk [vmem:[#allocation2 + $0xa0] sm:$0xff] %vm991, %v936
        %1013 = vst.msk [vmem:[#allocation2 + $0xa8] sm:$0xff] %vm991, %v938
        %1014 = vst.msk [vmem:[#allocation2 + $0xb0] sm:$0xff] %vm991, %v940
        %1015 = vst.msk [vmem:[#allocation2 + $0xb8] sm:$0xff] %vm991, %v942
        %1016 = vst.msk [vmem:[#allocation2 + $0xc0] sm:$0xff] %vm991, %v944
        %1017 = vst.msk [vmem:[#allocation2 + $0xc8] sm:$0xff] %vm991, %v946
        %1018 = vst.msk [vmem:[#allocation2 + $0xd0] sm:$0xff] %vm991, %v948
        %1019 = vst.msk [vmem:[#allocation2 + $0xd8] sm:$0xff] %vm991, %v950
        %1020 = vst.msk [vmem:[#allocation2 + $0xe0] sm:$0xff] %vm991, %v952
        %1021 = vst.msk [vmem:[#allocation2 + $0xe8] sm:$0xff] %vm991, %v954
        %1022 = vst.msk [vmem:[#allocation2 + $0xf0] sm:$0xff] %vm991, %v956
        %1023 = vst.msk [vmem:[#allocation2 + $0xf8] sm:$0xff] %vm991, %v958
        %v1024 = vld [vmem:[%s177 + $0x1] sm:$0xff]
        %v1025 = vld [vmem:[%s177 + $0x9] sm:$0x7f]
        %v1026 = vld [vmem:[%s177 + $0x11] sm:$0xff]
        %v1027 = vld [vmem:[%s177 + $0x19] sm:$0x7f]
        %v1028 = vld [vmem:[%s177 + $0x21] sm:$0xff]
        %v1029 = vld [vmem:[%s177 + $0x29] sm:$0x7f]
        %v1030 = vld [vmem:[%s177 + $0x31] sm:$0xff]
        %v1031 = vld [vmem:[%s177 + $0x39] sm:$0x7f]
        %v1032 = vld [vmem:[%s177 + $0x41] sm:$0xff]
        %v1033 = vld [vmem:[%s177 + $0x49] sm:$0x7f]
        %v1034 = vld [vmem:[%s177 + $0x51] sm:$0xff]
        %v1035 = vld [vmem:[%s177 + $0x59] sm:$0x7f]
        %v1036 = vld [vmem:[%s177 + $0x61] sm:$0xff]
        %v1037 = vld [vmem:[%s177 + $0x69] sm:$0x7f]
        %v1038 = vld [vmem:[%s177 + $0x71] sm:$0xff]
        %v1039 = vld [vmem:[%s177 + $0x79] sm:$0x7f]
        %v1040 = vld [vmem:[%s177 + $0x81] sm:$0xff]
        %v1041 = vld [vmem:[%s177 + $0x89] sm:$0x7f]
        %v1042 = vld [vmem:[%s177 + $0x91] sm:$0xff]
        %v1043 = vld [vmem:[%s177 + $0x99] sm:$0x7f]
        %v1044 = vld [vmem:[%s177 + $0xa1] sm:$0xff]
        %v1045 = vld [vmem:[%s177 + $0xa9] sm:$0x7f]
        %v1046 = vld [vmem:[%s177 + $0xb1] sm:$0xff]
        %v1047 = vld [vmem:[%s177 + $0xb9] sm:$0x7f]
        %v1048 = vld [vmem:[%s177 + $0xc1] sm:$0xff]
        %v1049 = vld [vmem:[%s177 + $0xc9] sm:$0x7f]
        %v1050 = vld [vmem:[%s177 + $0xd1] sm:$0xff]
        %v1051 = vld [vmem:[%s177 + $0xd9] sm:$0x7f]
        %v1052 = vld [vmem:[%s177 + $0xe1] sm:$0xff]
        %v1053 = vld [vmem:[%s177 + $0xe9] sm:$0x7f]
        %v1054 = vld [vmem:[%s177 + $0xf1] sm:$0xff]
        %v1055 = vld [vmem:[%s177 + $0xf9] sm:$0x7f]
        %1088 = vrot.lane.b32.xlu0 %v1024, 20
        %v1089 = vpop.permute.xlu0 %1088
        %1090 = vrot.lane.b32.xlu0 %v1025, 20
        %v1091 = vpop.permute.xlu0 %1090
        %1092 = vrot.lane.b32.xlu0 %v1026, 20
        %v1093 = vpop.permute.xlu0 %1092
        %1094 = vrot.lane.b32.xlu0 %v1027, 20
        %v1095 = vpop.permute.xlu0 %1094
        %1096 = vrot.lane.b32.xlu0 %v1028, 20
        %v1097 = vpop.permute.xlu0 %1096
        %1098 = vrot.lane.b32.xlu0 %v1029, 20
        %v1099 = vpop.permute.xlu0 %1098
        %1100 = vrot.lane.b32.xlu0 %v1030, 20
        %v1101 = vpop.permute.xlu0 %1100
        %1102 = vrot.lane.b32.xlu0 %v1031, 20
        %v1103 = vpop.permute.xlu0 %1102
        %1104 = vrot.lane.b32.xlu0 %v1032, 20
        %v1105 = vpop.permute.xlu0 %1104
        %1106 = vrot.lane.b32.xlu0 %v1033, 20
        %v1107 = vpop.permute.xlu0 %1106
        %1108 = vrot.lane.b32.xlu0 %v1034, 20
        %v1109 = vpop.permute.xlu0 %1108
        %1110 = vrot.lane.b32.xlu0 %v1035, 20
        %v1111 = vpop.permute.xlu0 %1110
        %1112 = vrot.lane.b32.xlu0 %v1036, 20
        %v1113 = vpop.permute.xlu0 %1112
        %1114 = vrot.lane.b32.xlu0 %v1037, 20
        %v1115 = vpop.permute.xlu0 %1114
        %1116 = vrot.lane.b32.xlu0 %v1038, 20
        %v1117 = vpop.permute.xlu0 %1116
        %1118 = vrot.lane.b32.xlu0 %v1039, 20
        %v1119 = vpop.permute.xlu0 %1118
        %1120 = vrot.lane.b32.xlu0 %v1040, 20
        %v1121 = vpop.permute.xlu0 %1120
        %1122 = vrot.lane.b32.xlu0 %v1041, 20
        %v1123 = vpop.permute.xlu0 %1122
        %1124 = vrot.lane.b32.xlu0 %v1042, 20
        %v1125 = vpop.permute.xlu0 %1124
        %1126 = vrot.lane.b32.xlu0 %v1043, 20
        %v1127 = vpop.permute.xlu0 %1126
        %1128 = vrot.lane.b32.xlu0 %v1044, 20
        %v1129 = vpop.permute.xlu0 %1128
        %1130 = vrot.lane.b32.xlu0 %v1045, 20
        %v1131 = vpop.permute.xlu0 %1130
        %1132 = vrot.lane.b32.xlu0 %v1046, 20
        %v1133 = vpop.permute.xlu0 %1132
        %1134 = vrot.lane.b32.xlu0 %v1047, 20
        %v1135 = vpop.permute.xlu0 %1134
        %1136 = vrot.lane.b32.xlu0 %v1048, 20
        %v1137 = vpop.permute.xlu0 %1136
        %1138 = vrot.lane.b32.xlu0 %v1049, 20
        %v1139 = vpop.permute.xlu0 %1138
        %1140 = vrot.lane.b32.xlu0 %v1050, 20
        %v1141 = vpop.permute.xlu0 %1140
        %1142 = vrot.lane.b32.xlu0 %v1051, 20
        %v1143 = vpop.permute.xlu0 %1142
        %1144 = vrot.lane.b32.xlu0 %v1052, 20
        %v1145 = vpop.permute.xlu0 %1144
        %1146 = vrot.lane.b32.xlu0 %v1053, 20
        %v1147 = vpop.permute.xlu0 %1146
        %1148 = vrot.lane.b32.xlu0 %v1054, 20
        %v1149 = vpop.permute.xlu0 %1148
        %1150 = vrot.lane.b32.xlu0 %v1055, 20
        %v1151 = vpop.permute.xlu0 %1150
        %vm1184 = vcmask 195744
        %1185 = vst.msk [vmem:[#allocation2] sm:$0xff] %vm1184, %v1089
        %vm1186 = vcmask 194720
        %1187 = vst.msk [vmem:[#allocation2 + $0x8] sm:$0x7f] %vm1186, %v1091
        %1188 = vst.msk [vmem:[#allocation2 + $0x10] sm:$0xff] %vm1184, %v1093
        %1189 = vst.msk [vmem:[#allocation2 + $0x18] sm:$0x7f] %vm1186, %v1095
        %1190 = vst.msk [vmem:[#allocation2 + $0x20] sm:$0xff] %vm1184, %v1097
        %1191 = vst.msk [vmem:[#allocation2 + $0x28] sm:$0x7f] %vm1186, %v1099
        %1192 = vst.msk [vmem:[#allocation2 + $0x30] sm:$0xff] %vm1184, %v1101
        %1193 = vst.msk [vmem:[#allocation2 + $0x38] sm:$0x7f] %vm1186, %v1103
        %1194 = vst.msk [vmem:[#allocation2 + $0x40] sm:$0xff] %vm1184, %v1105
        %1195 = vst.msk [vmem:[#allocation2 + $0x48] sm:$0x7f] %vm1186, %v1107
        %1196 = vst.msk [vmem:[#allocation2 + $0x50] sm:$0xff] %vm1184, %v1109
        %1197 = vst.msk [vmem:[#allocation2 + $0x58] sm:$0x7f] %vm1186, %v1111
        %1198 = vst.msk [vmem:[#allocation2 + $0x60] sm:$0xff] %vm1184, %v1113
        %1199 = vst.msk [vmem:[#allocation2 + $0x68] sm:$0x7f] %vm1186, %v1115
        %1200 = vst.msk [vmem:[#allocation2 + $0x70] sm:$0xff] %vm1184, %v1117
        %1201 = vst.msk [vmem:[#allocation2 + $0x78] sm:$0x7f] %vm1186, %v1119
        %1202 = vst.msk [vmem:[#allocation2 + $0x80] sm:$0xff] %vm1184, %v1121
        %1203 = vst.msk [vmem:[#allocation2 + $0x88] sm:$0x7f] %vm1186, %v1123
        %1204 = vst.msk [vmem:[#allocation2 + $0x90] sm:$0xff] %vm1184, %v1125
        %1205 = vst.msk [vmem:[#allocation2 + $0x98] sm:$0x7f] %vm1186, %v1127
        %1206 = vst.msk [vmem:[#allocation2 + $0xa0] sm:$0xff] %vm1184, %v1129
        %1207 = vst.msk [vmem:[#allocation2 + $0xa8] sm:$0x7f] %vm1186, %v1131
        %1208 = vst.msk [vmem:[#allocation2 + $0xb0] sm:$0xff] %vm1184, %v1133
        %1209 = vst.msk [vmem:[#allocation2 + $0xb8] sm:$0x7f] %vm1186, %v1135
        %1210 = vst.msk [vmem:[#allocation2 + $0xc0] sm:$0xff] %vm1184, %v1137
        %1211 = vst.msk [vmem:[#allocation2 + $0xc8] sm:$0x7f] %vm1186, %v1139
        %1212 = vst.msk [vmem:[#allocation2 + $0xd0] sm:$0xff] %vm1184, %v1141
        %1213 = vst.msk [vmem:[#allocation2 + $0xd8] sm:$0x7f] %vm1186, %v1143
        %1214 = vst.msk [vmem:[#allocation2 + $0xe0] sm:$0xff] %vm1184, %v1145
        %1215 = vst.msk [vmem:[#allocation2 + $0xe8] sm:$0x7f] %vm1186, %v1147
        %1216 = vst.msk [vmem:[#allocation2 + $0xf0] sm:$0xff] %vm1184, %v1149
        %1217 = vst.msk [vmem:[#allocation2 + $0xf8] sm:$0x7f] %vm1186, %v1151
        %s1218 = scalar_lea.vmem %s177, 16
        %v1219 = vld [vmem:[%s1218] sm:$0xff]
        %v1220 = vld [vmem:[%s1218 + $0x8] sm:$0x7f]
        %v1221 = vld [vmem:[%s1218 + $0x10] sm:$0xff]
        %v1222 = vld [vmem:[%s1218 + $0x18] sm:$0x7f]
        %v1223 = vld [vmem:[%s1218 + $0x20] sm:$0xff]
        %v1224 = vld [vmem:[%s1218 + $0x28] sm:$0x7f]
        %v1225 = vld [vmem:[%s1218 + $0x30] sm:$0xff]
        %v1226 = vld [vmem:[%s1218 + $0x38] sm:$0x7f]
        %v1227 = vld [vmem:[%s1218 + $0x40] sm:$0xff]
        %v1228 = vld [vmem:[%s1218 + $0x48] sm:$0x7f]
        %v1229 = vld [vmem:[%s1218 + $0x50] sm:$0xff]
        %v1230 = vld [vmem:[%s1218 + $0x58] sm:$0x7f]
        %v1231 = vld [vmem:[%s1218 + $0x60] sm:$0xff]
        %v1232 = vld [vmem:[%s1218 + $0x68] sm:$0x7f]
        %v1233 = vld [vmem:[%s1218 + $0x70] sm:$0xff]
        %v1234 = vld [vmem:[%s1218 + $0x78] sm:$0x7f]
        %v1235 = vld [vmem:[%s1218 + $0x80] sm:$0xff]
        %v1236 = vld [vmem:[%s1218 + $0x88] sm:$0x7f]
        %v1237 = vld [vmem:[%s1218 + $0x90] sm:$0xff]
        %v1238 = vld [vmem:[%s1218 + $0x98] sm:$0x7f]
        %v1239 = vld [vmem:[%s1218 + $0xa0] sm:$0xff]
        %v1240 = vld [vmem:[%s1218 + $0xa8] sm:$0x7f]
        %v1241 = vld [vmem:[%s1218 + $0xb0] sm:$0xff]
        %v1242 = vld [vmem:[%s1218 + $0xb8] sm:$0x7f]
        %v1243 = vld [vmem:[%s1218 + $0xc0] sm:$0xff]
        %v1244 = vld [vmem:[%s1218 + $0xc8] sm:$0x7f]
        %v1245 = vld [vmem:[%s1218 + $0xd0] sm:$0xff]
        %v1246 = vld [vmem:[%s1218 + $0xd8] sm:$0x7f]
        %v1247 = vld [vmem:[%s1218 + $0xe0] sm:$0xff]
        %v1248 = vld [vmem:[%s1218 + $0xe8] sm:$0x7f]
        %1279 = vrot.lane.b32.xlu0 %v1219, 24
        %v1280 = vpop.permute.xlu0 %1279
        %1281 = vrot.lane.b32.xlu0 %v1220, 24
        %v1282 = vpop.permute.xlu0 %1281
        %1283 = vrot.lane.b32.xlu0 %v1221, 24
        %v1284 = vpop.permute.xlu0 %1283
        %1285 = vrot.lane.b32.xlu0 %v1222, 24
        %v1286 = vpop.permute.xlu0 %1285
        %1287 = vrot.lane.b32.xlu0 %v1223, 24
        %v1288 = vpop.permute.xlu0 %1287
        %1289 = vrot.lane.b32.xlu0 %v1224, 24
        %v1290 = vpop.permute.xlu0 %1289
        %1291 = vrot.lane.b32.xlu0 %v1225, 24
        %v1292 = vpop.permute.xlu0 %1291
        %1293 = vrot.lane.b32.xlu0 %v1226, 24
        %v1294 = vpop.permute.xlu0 %1293
        %1295 = vrot.lane.b32.xlu0 %v1227, 24
        %v1296 = vpop.permute.xlu0 %1295
        %1297 = vrot.lane.b32.xlu0 %v1228, 24
        %v1298 = vpop.permute.xlu0 %1297
        %1299 = vrot.lane.b32.xlu0 %v1229, 24
        %v1300 = vpop.permute.xlu0 %1299
        %1301 = vrot.lane.b32.xlu0 %v1230, 24
        %v1302 = vpop.permute.xlu0 %1301
        %1303 = vrot.lane.b32.xlu0 %v1231, 24
        %v1304 = vpop.permute.xlu0 %1303
        %1305 = vrot.lane.b32.xlu0 %v1232, 24
        %v1306 = vpop.permute.xlu0 %1305
        %1307 = vrot.lane.b32.xlu0 %v1233, 24
        %v1308 = vpop.permute.xlu0 %1307
        %1309 = vrot.lane.b32.xlu0 %v1234, 24
        %v1310 = vpop.permute.xlu0 %1309
        %1311 = vrot.lane.b32.xlu0 %v1235, 24
        %v1312 = vpop.permute.xlu0 %1311
        %1313 = vrot.lane.b32.xlu0 %v1236, 24
        %v1314 = vpop.permute.xlu0 %1313
        %1315 = vrot.lane.b32.xlu0 %v1237, 24
        %v1316 = vpop.permute.xlu0 %1315
        %1317 = vrot.lane.b32.xlu0 %v1238, 24
        %v1318 = vpop.permute.xlu0 %1317
        %1319 = vrot.lane.b32.xlu0 %v1239, 24
        %v1320 = vpop.permute.xlu0 %1319
        %1321 = vrot.lane.b32.xlu0 %v1240, 24
        %v1322 = vpop.permute.xlu0 %1321
        %1323 = vrot.lane.b32.xlu0 %v1241, 24
        %v1324 = vpop.permute.xlu0 %1323
        %1325 = vrot.lane.b32.xlu0 %v1242, 24
        %v1326 = vpop.permute.xlu0 %1325
        %1327 = vrot.lane.b32.xlu0 %v1243, 24
        %v1328 = vpop.permute.xlu0 %1327
        %1329 = vrot.lane.b32.xlu0 %v1244, 24
        %v1330 = vpop.permute.xlu0 %1329
        %1331 = vrot.lane.b32.xlu0 %v1245, 24
        %v1332 = vpop.permute.xlu0 %1331
        %1333 = vrot.lane.b32.xlu0 %v1246, 24
        %v1334 = vpop.permute.xlu0 %1333
        %1335 = vrot.lane.b32.xlu0 %v1247, 24
        %v1336 = vpop.permute.xlu0 %1335
        %1337 = vrot.lane.b32.xlu0 %v1248, 24
        %v1338 = vpop.permute.xlu0 %1337
        %vm1369 = vcmask 228544
        %1370 = vst.msk [vmem:[#allocation2 + $0x1] sm:$0xff] %vm1369, %v1280
        %vm1371 = vcmask 227520
        %1372 = vst.msk [vmem:[#allocation2 + $0x9] sm:$0x7f] %vm1371, %v1282
        %1373 = vst.msk [vmem:[#allocation2 + $0x11] sm:$0xff] %vm1369, %v1284
        %1374 = vst.msk [vmem:[#allocation2 + $0x19] sm:$0x7f] %vm1371, %v1286
        %1375 = vst.msk [vmem:[#allocation2 + $0x21] sm:$0xff] %vm1369, %v1288
        %1376 = vst.msk [vmem:[#allocation2 + $0x29] sm:$0x7f] %vm1371, %v1290
        %1377 = vst.msk [vmem:[#allocation2 + $0x31] sm:$0xff] %vm1369, %v1292
        %1378 = vst.msk [vmem:[#allocation2 + $0x39] sm:$0x7f] %vm1371, %v1294
        %1379 = vst.msk [vmem:[#allocation2 + $0x41] sm:$0xff] %vm1369, %v1296
        %1380 = vst.msk [vmem:[#allocation2 + $0x49] sm:$0x7f] %vm1371, %v1298
        %1381 = vst.msk [vmem:[#allocation2 + $0x51] sm:$0xff] %vm1369, %v1300
        %1382 = vst.msk [vmem:[#allocation2 + $0x59] sm:$0x7f] %vm1371, %v1302
        %1383 = vst.msk [vmem:[#allocation2 + $0x61] sm:$0xff] %vm1369, %v1304
        %1384 = vst.msk [vmem:[#allocation2 + $0x69] sm:$0x7f] %vm1371, %v1306
        %1385 = vst.msk [vmem:[#allocation2 + $0x71] sm:$0xff] %vm1369, %v1308
        %1386 = vst.msk [vmem:[#allocation2 + $0x79] sm:$0x7f] %vm1371, %v1310
        %1387 = vst.msk [vmem:[#allocation2 + $0x81] sm:$0xff] %vm1369, %v1312
        %1388 = vst.msk [vmem:[#allocation2 + $0x89] sm:$0x7f] %vm1371, %v1314
        %1389 = vst.msk [vmem:[#allocation2 + $0x91] sm:$0xff] %vm1369, %v1316
        %1390 = vst.msk [vmem:[#allocation2 + $0x99] sm:$0x7f] %vm1371, %v1318
        %1391 = vst.msk [vmem:[#allocation2 + $0xa1] sm:$0xff] %vm1369, %v1320
        %1392 = vst.msk [vmem:[#allocation2 + $0xa9] sm:$0x7f] %vm1371, %v1322
        %1393 = vst.msk [vmem:[#allocation2 + $0xb1] sm:$0xff] %vm1369, %v1324
        %1394 = vst.msk [vmem:[#allocation2 + $0xb9] sm:$0x7f] %vm1371, %v1326
        %1395 = vst.msk [vmem:[#allocation2 + $0xc1] sm:$0xff] %vm1369, %v1328
        %1396 = vst.msk [vmem:[#allocation2 + $0xc9] sm:$0x7f] %vm1371, %v1330
        %1397 = vst.msk [vmem:[#allocation2 + $0xd1] sm:$0xff] %vm1369, %v1332
        %1398 = vst.msk [vmem:[#allocation2 + $0xd9] sm:$0x7f] %vm1371, %v1334
        %1399 = vst.msk [vmem:[#allocation2 + $0xe1] sm:$0xff] %vm1369, %v1336
        %1400 = vst.msk [vmem:[#allocation2 + $0xe9] sm:$0x7f] %vm1371, %v1338
        %v1401 = vld [vmem:[%s1218] sm:$0xff]
        %v1402 = vld [vmem:[%s1218 + $0x8] sm:$0xff]
        %v1403 = vld [vmem:[%s1218 + $0x10] sm:$0xff]
        %v1404 = vld [vmem:[%s1218 + $0x18] sm:$0xff]
        %v1405 = vld [vmem:[%s1218 + $0x20] sm:$0xff]
        %v1406 = vld [vmem:[%s1218 + $0x28] sm:$0xff]
        %v1407 = vld [vmem:[%s1218 + $0x30] sm:$0xff]
        %v1408 = vld [vmem:[%s1218 + $0x38] sm:$0xff]
        %v1409 = vld [vmem:[%s1218 + $0x40] sm:$0xff]
        %v1410 = vld [vmem:[%s1218 + $0x48] sm:$0xff]
        %v1411 = vld [vmem:[%s1218 + $0x50] sm:$0xff]
        %v1412 = vld [vmem:[%s1218 + $0x58] sm:$0xff]
        %v1413 = vld [vmem:[%s1218 + $0x60] sm:$0xff]
        %v1414 = vld [vmem:[%s1218 + $0x68] sm:$0xff]
        %v1415 = vld [vmem:[%s1218 + $0x70] sm:$0xff]
        %v1416 = vld [vmem:[%s1218 + $0x78] sm:$0xff]
        %v1417 = vld [vmem:[%s1218 + $0x80] sm:$0xff]
        %v1418 = vld [vmem:[%s1218 + $0x88] sm:$0xff]
        %v1419 = vld [vmem:[%s1218 + $0x90] sm:$0xff]
        %v1420 = vld [vmem:[%s1218 + $0x98] sm:$0xff]
        %v1421 = vld [vmem:[%s1218 + $0xa0] sm:$0xff]
        %v1422 = vld [vmem:[%s1218 + $0xa8] sm:$0xff]
        %v1423 = vld [vmem:[%s1218 + $0xb0] sm:$0xff]
        %v1424 = vld [vmem:[%s1218 + $0xb8] sm:$0xff]
        %v1425 = vld [vmem:[%s1218 + $0xc0] sm:$0xff]
        %v1426 = vld [vmem:[%s1218 + $0xc8] sm:$0xff]
        %v1427 = vld [vmem:[%s1218 + $0xd0] sm:$0xff]
        %v1428 = vld [vmem:[%s1218 + $0xd8] sm:$0xff]
        %v1429 = vld [vmem:[%s1218 + $0xe0] sm:$0xff]
        %v1430 = vld [vmem:[%s1218 + $0xe8] sm:$0xff]
        %1461 = vrot.lane.b32.xlu0 %v1401, 28
        %v1462 = vpop.permute.xlu0 %1461
        %1463 = vrot.lane.b32.xlu0 %v1402, 28
        %v1464 = vpop.permute.xlu0 %1463
        %1465 = vrot.lane.b32.xlu0 %v1403, 28
        %v1466 = vpop.permute.xlu0 %1465
        %1467 = vrot.lane.b32.xlu0 %v1404, 28
        %v1468 = vpop.permute.xlu0 %1467
        %1469 = vrot.lane.b32.xlu0 %v1405, 28
        %v1470 = vpop.permute.xlu0 %1469
        %1471 = vrot.lane.b32.xlu0 %v1406, 28
        %v1472 = vpop.permute.xlu0 %1471
        %1473 = vrot.lane.b32.xlu0 %v1407, 28
        %v1474 = vpop.permute.xlu0 %1473
        %1475 = vrot.lane.b32.xlu0 %v1408, 28
        %v1476 = vpop.permute.xlu0 %1475
        %1477 = vrot.lane.b32.xlu0 %v1409, 28
        %v1478 = vpop.permute.xlu0 %1477
        %1479 = vrot.lane.b32.xlu0 %v1410, 28
        %v1480 = vpop.permute.xlu0 %1479
        %1481 = vrot.lane.b32.xlu0 %v1411, 28
        %v1482 = vpop.permute.xlu0 %1481
        %1483 = vrot.lane.b32.xlu0 %v1412, 28
        %v1484 = vpop.permute.xlu0 %1483
        %1485 = vrot.lane.b32.xlu0 %v1413, 28
        %v1486 = vpop.permute.xlu0 %1485
        %1487 = vrot.lane.b32.xlu0 %v1414, 28
        %v1488 = vpop.permute.xlu0 %1487
        %1489 = vrot.lane.b32.xlu0 %v1415, 28
        %v1490 = vpop.permute.xlu0 %1489
        %1491 = vrot.lane.b32.xlu0 %v1416, 28
        %v1492 = vpop.permute.xlu0 %1491
        %1493 = vrot.lane.b32.xlu0 %v1417, 28
        %v1494 = vpop.permute.xlu0 %1493
        %1495 = vrot.lane.b32.xlu0 %v1418, 28
        %v1496 = vpop.permute.xlu0 %1495
        %1497 = vrot.lane.b32.xlu0 %v1419, 28
        %v1498 = vpop.permute.xlu0 %1497
        %1499 = vrot.lane.b32.xlu0 %v1420, 28
        %v1500 = vpop.permute.xlu0 %1499
        %1501 = vrot.lane.b32.xlu0 %v1421, 28
        %v1502 = vpop.permute.xlu0 %1501
        %1503 = vrot.lane.b32.xlu0 %v1422, 28
        %v1504 = vpop.permute.xlu0 %1503
        %1505 = vrot.lane.b32.xlu0 %v1423, 28
        %v1506 = vpop.permute.xlu0 %1505
        %1507 = vrot.lane.b32.xlu0 %v1424, 28
        %v1508 = vpop.permute.xlu0 %1507
        %1509 = vrot.lane.b32.xlu0 %v1425, 28
        %v1510 = vpop.permute.xlu0 %1509
        %1511 = vrot.lane.b32.xlu0 %v1426, 28
        %v1512 = vpop.permute.xlu0 %1511
        %1513 = vrot.lane.b32.xlu0 %v1427, 28
        %v1514 = vpop.permute.xlu0 %1513
        %1515 = vrot.lane.b32.xlu0 %v1428, 28
        %v1516 = vpop.permute.xlu0 %1515
        %1517 = vrot.lane.b32.xlu0 %v1429, 28
        %v1518 = vpop.permute.xlu0 %1517
        %1519 = vrot.lane.b32.xlu0 %v1430, 28
        %v1520 = vpop.permute.xlu0 %1519
        %vm1551 = vcmask 261344
        %1552 = vst.msk [vmem:[#allocation2] sm:$0xff] %vm1551, %v1462
        %1553 = vst.msk [vmem:[#allocation2 + $0x8] sm:$0xff] %vm1551, %v1464
        %1554 = vst.msk [vmem:[#allocation2 + $0x10] sm:$0xff] %vm1551, %v1466
        %1555 = vst.msk [vmem:[#allocation2 + $0x18] sm:$0xff] %vm1551, %v1468
        %1556 = vst.msk [vmem:[#allocation2 + $0x20] sm:$0xff] %vm1551, %v1470
        %1557 = vst.msk [vmem:[#allocation2 + $0x28] sm:$0xff] %vm1551, %v1472
        %1558 = vst.msk [vmem:[#allocation2 + $0x30] sm:$0xff] %vm1551, %v1474
        %1559 = vst.msk [vmem:[#allocation2 + $0x38] sm:$0xff] %vm1551, %v1476
        %1560 = vst.msk [vmem:[#allocation2 + $0x40] sm:$0xff] %vm1551, %v1478
        %1561 = vst.msk [vmem:[#allocation2 + $0x48] sm:$0xff] %vm1551, %v1480
        %1562 = vst.msk [vmem:[#allocation2 + $0x50] sm:$0xff] %vm1551, %v1482
        %1563 = vst.msk [vmem:[#allocation2 + $0x58] sm:$0xff] %vm1551, %v1484
        %1564 = vst.msk [vmem:[#allocation2 + $0x60] sm:$0xff] %vm1551, %v1486
        %1565 = vst.msk [vmem:[#allocation2 + $0x68] sm:$0xff] %vm1551, %v1488
        %1566 = vst.msk [vmem:[#allocation2 + $0x70] sm:$0xff] %vm1551, %v1490
        %1567 = vst.msk [vmem:[#allocation2 + $0x78] sm:$0xff] %vm1551, %v1492
        %1568 = vst.msk [vmem:[#allocation2 + $0x80] sm:$0xff] %vm1551, %v1494
        %1569 = vst.msk [vmem:[#allocation2 + $0x88] sm:$0xff] %vm1551, %v1496
        %1570 = vst.msk [vmem:[#allocation2 + $0x90] sm:$0xff] %vm1551, %v1498
        %1571 = vst.msk [vmem:[#allocation2 + $0x98] sm:$0xff] %vm1551, %v1500
        %1572 = vst.msk [vmem:[#allocation2 + $0xa0] sm:$0xff] %vm1551, %v1502
        %1573 = vst.msk [vmem:[#allocation2 + $0xa8] sm:$0xff] %vm1551, %v1504
        %1574 = vst.msk [vmem:[#allocation2 + $0xb0] sm:$0xff] %vm1551, %v1506
        %1575 = vst.msk [vmem:[#allocation2 + $0xb8] sm:$0xff] %vm1551, %v1508
        %1576 = vst.msk [vmem:[#allocation2 + $0xc0] sm:$0xff] %vm1551, %v1510
        %1577 = vst.msk [vmem:[#allocation2 + $0xc8] sm:$0xff] %vm1551, %v1512
        %1578 = vst.msk [vmem:[#allocation2 + $0xd0] sm:$0xff] %vm1551, %v1514
        %1579 = vst.msk [vmem:[#allocation2 + $0xd8] sm:$0xff] %vm1551, %v1516
        %1580 = vst.msk [vmem:[#allocation2 + $0xe0] sm:$0xff] %vm1551, %v1518
        %1581 = vst.msk [vmem:[#allocation2 + $0xe8] sm:$0xff] %vm1551, %v1520
        %v1582 = vld [vmem:[%s1218 + $0x1] sm:$0xff]
        %v1583 = vld [vmem:[%s1218 + $0x9] sm:$0x7f]
        %v1584 = vld [vmem:[%s1218 + $0x11] sm:$0xff]
        %v1585 = vld [vmem:[%s1218 + $0x19] sm:$0x7f]
        %v1586 = vld [vmem:[%s1218 + $0x21] sm:$0xff]
        %v1587 = vld [vmem:[%s1218 + $0x29] sm:$0x7f]
        %v1588 = vld [vmem:[%s1218 + $0x31] sm:$0xff]
        %v1589 = vld [vmem:[%s1218 + $0x39] sm:$0x7f]
        %v1590 = vld [vmem:[%s1218 + $0x41] sm:$0xff]
        %v1591 = vld [vmem:[%s1218 + $0x49] sm:$0x7f]
        %v1592 = vld [vmem:[%s1218 + $0x51] sm:$0xff]
        %v1593 = vld [vmem:[%s1218 + $0x59] sm:$0x7f]
        %v1594 = vld [vmem:[%s1218 + $0x61] sm:$0xff]
        %v1595 = vld [vmem:[%s1218 + $0x69] sm:$0x7f]
        %v1596 = vld [vmem:[%s1218 + $0x71] sm:$0xff]
        %v1597 = vld [vmem:[%s1218 + $0x79] sm:$0x7f]
        %v1598 = vld [vmem:[%s1218 + $0x81] sm:$0xff]
        %v1599 = vld [vmem:[%s1218 + $0x89] sm:$0x7f]
        %v1600 = vld [vmem:[%s1218 + $0x91] sm:$0xff]
        %v1601 = vld [vmem:[%s1218 + $0x99] sm:$0x7f]
        %v1602 = vld [vmem:[%s1218 + $0xa1] sm:$0xff]
        %v1603 = vld [vmem:[%s1218 + $0xa9] sm:$0x7f]
        %v1604 = vld [vmem:[%s1218 + $0xb1] sm:$0xff]
        %v1605 = vld [vmem:[%s1218 + $0xb9] sm:$0x7f]
        %v1606 = vld [vmem:[%s1218 + $0xc1] sm:$0xff]
        %v1607 = vld [vmem:[%s1218 + $0xc9] sm:$0x7f]
        %v1608 = vld [vmem:[%s1218 + $0xd1] sm:$0xff]
        %v1609 = vld [vmem:[%s1218 + $0xd9] sm:$0x7f]
        %v1610 = vld [vmem:[%s1218 + $0xe1] sm:$0xff]
        %v1611 = vld [vmem:[%s1218 + $0xe9] sm:$0x7f]
        %1642 = vrot.lane.b32.xlu0 %v1582, 32
        %v1643 = vpop.permute.xlu0 %1642
        %1644 = vrot.lane.b32.xlu0 %v1583, 32
        %v1645 = vpop.permute.xlu0 %1644
        %1646 = vrot.lane.b32.xlu0 %v1584, 32
        %v1647 = vpop.permute.xlu0 %1646
        %1648 = vrot.lane.b32.xlu0 %v1585, 32
        %v1649 = vpop.permute.xlu0 %1648
        %1650 = vrot.lane.b32.xlu0 %v1586, 32
        %v1651 = vpop.permute.xlu0 %1650
        %1652 = vrot.lane.b32.xlu0 %v1587, 32
        %v1653 = vpop.permute.xlu0 %1652
        %1654 = vrot.lane.b32.xlu0 %v1588, 32
        %v1655 = vpop.permute.xlu0 %1654
        %1656 = vrot.lane.b32.xlu0 %v1589, 32
        %v1657 = vpop.permute.xlu0 %1656
        %1658 = vrot.lane.b32.xlu0 %v1590, 32
        %v1659 = vpop.permute.xlu0 %1658
        %1660 = vrot.lane.b32.xlu0 %v1591, 32
        %v1661 = vpop.permute.xlu0 %1660
        %1662 = vrot.lane.b32.xlu0 %v1592, 32
        %v1663 = vpop.permute.xlu0 %1662
        %1664 = vrot.lane.b32.xlu0 %v1593, 32
        %v1665 = vpop.permute.xlu0 %1664
        %1666 = vrot.lane.b32.xlu0 %v1594, 32
        %v1667 = vpop.permute.xlu0 %1666
        %1668 = vrot.lane.b32.xlu0 %v1595, 32
        %v1669 = vpop.permute.xlu0 %1668
        %1670 = vrot.lane.b32.xlu0 %v1596, 32
        %v1671 = vpop.permute.xlu0 %1670
        %1672 = vrot.lane.b32.xlu0 %v1597, 32
        %v1673 = vpop.permute.xlu0 %1672
        %1674 = vrot.lane.b32.xlu0 %v1598, 32
        %v1675 = vpop.permute.xlu0 %1674
        %1676 = vrot.lane.b32.xlu0 %v1599, 32
        %v1677 = vpop.permute.xlu0 %1676
        %1678 = vrot.lane.b32.xlu0 %v1600, 32
        %v1679 = vpop.permute.xlu0 %1678
        %1680 = vrot.lane.b32.xlu0 %v1601, 32
        %v1681 = vpop.permute.xlu0 %1680
        %1682 = vrot.lane.b32.xlu0 %v1602, 32
        %v1683 = vpop.permute.xlu0 %1682
        %1684 = vrot.lane.b32.xlu0 %v1603, 32
        %v1685 = vpop.permute.xlu0 %1684
        %1686 = vrot.lane.b32.xlu0 %v1604, 32
        %v1687 = vpop.permute.xlu0 %1686
        %1688 = vrot.lane.b32.xlu0 %v1605, 32
        %v1689 = vpop.permute.xlu0 %1688
        %1690 = vrot.lane.b32.xlu0 %v1606, 32
        %v1691 = vpop.permute.xlu0 %1690
        %1692 = vrot.lane.b32.xlu0 %v1607, 32
        %v1693 = vpop.permute.xlu0 %1692
        %1694 = vrot.lane.b32.xlu0 %v1608, 32
        %v1695 = vpop.permute.xlu0 %1694
        %1696 = vrot.lane.b32.xlu0 %v1609, 32
        %v1697 = vpop.permute.xlu0 %1696
        %1698 = vrot.lane.b32.xlu0 %v1610, 32
        %v1699 = vpop.permute.xlu0 %1698
        %1700 = vrot.lane.b32.xlu0 %v1611, 32
        %v1701 = vpop.permute.xlu0 %1700
        %vm1732 = vcmask 294144
        %1733 = vst.msk [vmem:[#allocation2] sm:$0xff] %vm1732, %v1643
        %vm1734 = vcmask 293120
        %1735 = vst.msk [vmem:[#allocation2 + $0x8] sm:$0x7f] %vm1734, %v1645
        %1736 = vst.msk [vmem:[#allocation2 + $0x10] sm:$0xff] %vm1732, %v1647
        %1737 = vst.msk [vmem:[#allocation2 + $0x18] sm:$0x7f] %vm1734, %v1649
        %1738 = vst.msk [vmem:[#allocation2 + $0x20] sm:$0xff] %vm1732, %v1651
        %1739 = vst.msk [vmem:[#allocation2 + $0x28] sm:$0x7f] %vm1734, %v1653
        %1740 = vst.msk [vmem:[#allocation2 + $0x30] sm:$0xff] %vm1732, %v1655
        %1741 = vst.msk [vmem:[#allocation2 + $0x38] sm:$0x7f] %vm1734, %v1657
        %1742 = vst.msk [vmem:[#allocation2 + $0x40] sm:$0xff] %vm1732, %v1659
        %1743 = vst.msk [vmem:[#allocation2 + $0x48] sm:$0x7f] %vm1734, %v1661
        %1744 = vst.msk [vmem:[#allocation2 + $0x50] sm:$0xff] %vm1732, %v1663
        %1745 = vst.msk [vmem:[#allocation2 + $0x58] sm:$0x7f] %vm1734, %v1665
        %1746 = vst.msk [vmem:[#allocation2 + $0x60] sm:$0xff] %vm1732, %v1667
        %1747 = vst.msk [vmem:[#allocation2 + $0x68] sm:$0x7f] %vm1734, %v1669
        %1748 = vst.msk [vmem:[#allocation2 + $0x70] sm:$0xff] %vm1732, %v1671
        %1749 = vst.msk [vmem:[#allocation2 + $0x78] sm:$0x7f] %vm1734, %v1673
        %1750 = vst.msk [vmem:[#allocation2 + $0x80] sm:$0xff] %vm1732, %v1675
        %1751 = vst.msk [vmem:[#allocation2 + $0x88] sm:$0x7f] %vm1734, %v1677
        %1752 = vst.msk [vmem:[#allocation2 + $0x90] sm:$0xff] %vm1732, %v1679
        %1753 = vst.msk [vmem:[#allocation2 + $0x98] sm:$0x7f] %vm1734, %v1681
        %1754 = vst.msk [vmem:[#allocation2 + $0xa0] sm:$0xff] %vm1732, %v1683
        %1755 = vst.msk [vmem:[#allocation2 + $0xa8] sm:$0x7f] %vm1734, %v1685
        %1756 = vst.msk [vmem:[#allocation2 + $0xb0] sm:$0xff] %vm1732, %v1687
        %1757 = vst.msk [vmem:[#allocation2 + $0xb8] sm:$0x7f] %vm1734, %v1689
        %1758 = vst.msk [vmem:[#allocation2 + $0xc0] sm:$0xff] %vm1732, %v1691
        %1759 = vst.msk [vmem:[#allocation2 + $0xc8] sm:$0x7f] %vm1734, %v1693
        %1760 = vst.msk [vmem:[#allocation2 + $0xd0] sm:$0xff] %vm1732, %v1695
        %1761 = vst.msk [vmem:[#allocation2 + $0xd8] sm:$0x7f] %vm1734, %v1697
        %1762 = vst.msk [vmem:[#allocation2 + $0xe0] sm:$0xff] %vm1732, %v1699
        %1763 = vst.msk [vmem:[#allocation2 + $0xe8] sm:$0x7f] %vm1734, %v1701
        %v1764 = vld [vmem:[#allocation2] sm:$0xff]
        %v1765 = vld [vmem:[#allocation2 + $0x8] sm:$0xff]
        %v1766 = vld [vmem:[#allocation2 + $0x10] sm:$0xff]
        %v1767 = vld [vmem:[#allocation2 + $0x18] sm:$0xff]
        %v1768 = vld [vmem:[#allocation2 + $0x20] sm:$0xff]
        %v1769 = vld [vmem:[#allocation2 + $0x28] sm:$0xff]
        %v1770 = vld [vmem:[#allocation2 + $0x30] sm:$0xff]
        %v1771 = vld [vmem:[#allocation2 + $0x38] sm:$0xff]
        %v1772 = vld [vmem:[#allocation2 + $0x40] sm:$0xff]
        %v1773 = vld [vmem:[#allocation2 + $0x48] sm:$0xff]
        %v1774 = vld [vmem:[#allocation2 + $0x50] sm:$0xff]
        %v1775 = vld [vmem:[#allocation2 + $0x58] sm:$0xff]
        %v1776 = vld [vmem:[#allocation2 + $0x60] sm:$0xff]
        %v1777 = vld [vmem:[#allocation2 + $0x68] sm:$0xff]
        %v1778 = vld [vmem:[#allocation2 + $0x70] sm:$0xff]
        %v1779 = vld [vmem:[#allocation2 + $0x78] sm:$0xff]
        %v1780 = vld [vmem:[#allocation2 + $0x80] sm:$0xff]
        %v1781 = vld [vmem:[#allocation2 + $0x88] sm:$0xff]
        %v1782 = vld [vmem:[#allocation2 + $0x90] sm:$0xff]
        %v1783 = vld [vmem:[#allocation2 + $0x98] sm:$0xff]
        %v1784 = vld [vmem:[#allocation2 + $0xa0] sm:$0xff]
        %v1785 = vld [vmem:[#allocation2 + $0xa8] sm:$0xff]
        %v1786 = vld [vmem:[#allocation2 + $0xb0] sm:$0xff]
        %v1787 = vld [vmem:[#allocation2 + $0xb8] sm:$0xff]
        %v1788 = vld [vmem:[#allocation2 + $0xc0] sm:$0xff]
        %v1789 = vld [vmem:[#allocation2 + $0xc8] sm:$0xff]
        %v1790 = vld [vmem:[#allocation2 + $0xd0] sm:$0xff]
        %v1791 = vld [vmem:[#allocation2 + $0xd8] sm:$0xff]
        %v1792 = vld [vmem:[#allocation2 + $0xe0] sm:$0xff]
        %v1793 = vld [vmem:[#allocation2 + $0xe8] sm:$0xff]
        %v1794 = vld [vmem:[#allocation2 + $0xf0] sm:$0xff]
        %v1795 = vld [vmem:[#allocation2 + $0xf8] sm:$0xff]
        %v1796 = vpack.c.bf16 %v1765, %v1764
        %v1797 = vpack.c.bf16 %v1767, %v1766
        %v1798 = vpack.c.bf16 %v1769, %v1768
        %v1799 = vpack.c.bf16 %v1771, %v1770
        %v1800 = vpack.c.bf16 %v1773, %v1772
        %v1801 = vpack.c.bf16 %v1775, %v1774
        %v1802 = vpack.c.bf16 %v1777, %v1776
        %v1803 = vpack.c.bf16 %v1779, %v1778
        %v1804 = vpack.c.bf16 %v1781, %v1780
        %v1805 = vpack.c.bf16 %v1783, %v1782
        %v1806 = vpack.c.bf16 %v1785, %v1784
        %v1807 = vpack.c.bf16 %v1787, %v1786
        %v1808 = vpack.c.bf16 %v1789, %v1788
        %v1809 = vpack.c.bf16 %v1791, %v1790
        %v1810 = vpack.c.bf16 %v1793, %v1792
        %v1811 = vpack.c.bf16 %v1795, %v1794
        %v1812 = vld [vmem:[%s1] sm:$0xf]
        %v1813 = vld [vmem:[%s1 + $0x4] sm:$0xf]
        %v1814 = vld [vmem:[%s1 + $0x8] sm:$0xf]
        %v1815 = vld [vmem:[%s1 + $0xc] sm:$0xf]
        %v1816 = vld [vmem:[%s1 + $0x10] sm:$0xf]
        %v1817 = vld [vmem:[%s1 + $0x14] sm:$0xf]
        %v1818 = vld [vmem:[%s1 + $0x18] sm:$0xf]
        %v1819 = vld [vmem:[%s1 + $0x1c] sm:$0xf]
        %v1820 = vld [vmem:[%s1 + $0x20] sm:$0xf]
        %v1821 = vld [vmem:[%s1 + $0x24] sm:$0xf]
        %v1822 = vld [vmem:[%s1 + $0x28] sm:$0xf]
        %v1823 = vld [vmem:[%s1 + $0x2c] sm:$0xf]
        %v1824 = vld [vmem:[%s1 + $0x30] sm:$0xf]
        %v1825 = vld [vmem:[%s1 + $0x34] sm:$0xf]
        %v1826 = vld [vmem:[%s1 + $0x38] sm:$0xf]
        %v1827 = vld [vmem:[%s1 + $0x3c] sm:$0xf]
        %v1844 = vunpack.c.l.b16 %v1812
        %v1845 = vunpack.c.l.b16 %v1813
        %v1846 = vunpack.c.l.b16 %v1814
        %v1847 = vunpack.c.l.b16 %v1815
        %v1848 = vunpack.c.l.b16 %v1816
        %v1849 = vunpack.c.l.b16 %v1817
        %v1850 = vunpack.c.l.b16 %v1818
        %v1851 = vunpack.c.l.b16 %v1819
        %v1852 = vunpack.c.l.b16 %v1820
        %v1853 = vunpack.c.l.b16 %v1821
        %v1854 = vunpack.c.l.b16 %v1822
        %v1855 = vunpack.c.l.b16 %v1823
        %v1856 = vunpack.c.l.b16 %v1824
        %v1857 = vunpack.c.l.b16 %v1825
        %v1858 = vunpack.c.l.b16 %v1826
        %v1859 = vunpack.c.l.b16 %v1827
        %v1860 = vpack.c.b16 %v1845, %v1844
        %v1861 = vpack.c.b16 %v1847, %v1846
        %v1862 = vpack.c.b16 %v1849, %v1848
        %v1863 = vpack.c.b16 %v1851, %v1850
        %v1864 = vpack.c.b16 %v1853, %v1852
        %v1865 = vpack.c.b16 %v1855, %v1854
        %v1866 = vpack.c.b16 %v1857, %v1856
        %v1867 = vpack.c.b16 %v1859, %v1858
        %1876 = vmatprep.subr.bf16.mxu0 0
        %1877 = vmatpush1.bf16.msra.mxu0 %v1860
        %1878 = vmatprep.subr.bf16.mxu0 0
        %1879 = vmatpush1.bf16.msra.mxu0 %v1861
        %1880 = vmatprep.subr.bf16.mxu0 0
        %1881 = vmatpush1.bf16.msra.mxu0 %v1862
        %1882 = vmatprep.subr.bf16.mxu0 0
        %1883 = vmatpush1.bf16.msra.mxu0 %v1863
        %1884 = vmatprep.subr.bf16.mxu0 0
        %1885 = vmatpush1.bf16.msra.mxu0 %v1864
        %1886 = vmatprep.subr.bf16.mxu0 0
        %1887 = vmatpush1.bf16.msra.mxu0 %v1865
        %1888 = vmatprep.subr.bf16.mxu0 0
        %1889 = vmatpush1.bf16.msra.mxu0 %v1866
        %1890 = vmatprep.subr.bf16.mxu0 0
        %1891 = vmatpush1.bf16.msra.mxu0 %v1867
        %1892 = vmatprep.subr.bf16.mxu0 0
        %1893 = vmatpush1.bf16.msra.mxu0 0
        %1894 = vmatprep.subr.bf16.mxu0 0
        %1895 = vmatpush1.bf16.msra.mxu0 0
        %1896 = vmatprep.subr.bf16.mxu0 0
        %1897 = vmatpush1.bf16.msra.mxu0 0
        %1898 = vmatprep.subr.bf16.mxu0 0
        %1899 = vmatpush1.bf16.msra.mxu0 0
        %1900 = vmatprep.subr.bf16.mxu0 0
        %1901 = vmatpush1.bf16.msra.mxu0 0
        %1902 = vmatprep.subr.bf16.mxu0 0
        %1903 = vmatpush1.bf16.msra.mxu0 0
        %1904 = vmatprep.subr.bf16.mxu0 0
        %1905 = vmatpush1.bf16.msra.mxu0 0
        %1906 = vmatprep.subr.bf16.mxu0 0
        %1907 = vmatpush1.bf16.msra.mxu0 0
        %1908 = vmatprep.mubr.bf16.mxu0 0
        %1909 = vmatmul.mubr.bf16.gmra.mrb[0].mxu0 %v1796
        %v1910 = vpop.f32.mrb[0].mxu0
        %v1911 = vadd.f32 0.0, %v1910
        %v1912 = vpop.f32.mrb[0].mxu0
        %v1913 = vpop.f32.mrb[0].mxu0
        %v1914 = vadd.f32 0.0, %v1913
        %v1915 = vpop.f32.mrb[0].mxu0
        %1916 = vmatprep.mubr.bf16.mxu0 0
        %1917 = vmatmul.mubr.bf16.gmra.mrb[0].mxu0 %v1797
        %v1918 = vpop.f32.mrb[0].mxu0
        %v1919 = vadd.f32 0.0, %v1918
        %v1920 = vpop.f32.mrb[0].mxu0
        %v1921 = vpop.f32.mrb[0].mxu0
        %v1922 = vadd.f32 0.0, %v1921
        %v1923 = vpop.f32.mrb[0].mxu0
        %1924 = vmatprep.mubr.bf16.mxu0 0
        %1925 = vmatmul.mubr.bf16.gmra.mrb[0].mxu0 %v1798
        %v1926 = vpop.f32.mrb[0].mxu0
        %v1927 = vadd.f32 0.0, %v1926
        %v1928 = vpop.f32.mrb[0].mxu0
        %v1929 = vpop.f32.mrb[0].mxu0
        %v1930 = vadd.f32 0.0, %v1929
        %v1931 = vpop.f32.mrb[0].mxu0
        %1932 = vmatprep.mubr.bf16.mxu0 0
        %1933 = vmatmul.mubr.bf16.gmra.mrb[0].mxu0 %v1799
        %v1934 = vpop.f32.mrb[0].mxu0
        %v1935 = vadd.f32 0.0, %v1934
        %v1936 = vpop.f32.mrb[0].mxu0
        %v1937 = vpop.f32.mrb[0].mxu0
        %v1938 = vadd.f32 0.0, %v1937
        %v1939 = vpop.f32.mrb[0].mxu0
        %1940 = vmatprep.mubr.bf16.mxu0 0
        %1941 = vmatmul.mubr.bf16.gmra.mrb[0].mxu0 %v1800
        %v1942 = vpop.f32.mrb[0].mxu0
        %v1943 = vadd.f32 0.0, %v1942
        %v1944 = vpop.f32.mrb[0].mxu0
        %v1945 = vpop.f32.mrb[0].mxu0
        %v1946 = vadd.f32 0.0, %v1945
        %v1947 = vpop.f32.mrb[0].mxu0
        %1948 = vmatprep.mubr.bf16.mxu0 0
        %1949 = vmatmul.mubr.bf16.gmra.mrb[0].mxu0 %v1801
        %v1950 = vpop.f32.mrb[0].mxu0
        %v1951 = vadd.f32 0.0, %v1950
        %v1952 = vpop.f32.mrb[0].mxu0
        %v1953 = vpop.f32.mrb[0].mxu0
        %v1954 = vadd.f32 0.0, %v1953
        %v1955 = vpop.f32.mrb[0].mxu0
        %1956 = vmatprep.mubr.bf16.mxu0 0
        %1957 = vmatmul.mubr.bf16.gmra.mrb[0].mxu0 %v1802
        %v1958 = vpop.f32.mrb[0].mxu0
        %v1959 = vadd.f32 0.0, %v1958
        %v1960 = vpop.f32.mrb[0].mxu0
        %v1961 = vpop.f32.mrb[0].mxu0
        %v1962 = vadd.f32 0.0, %v1961
        %v1963 = vpop.f32.mrb[0].mxu0
        %1964 = vmatprep.mubr.bf16.mxu0 0
        %1965 = vmatmul.mubr.bf16.gmra.mrb[0].mxu0 %v1803
        %v1966 = vpop.f32.mrb[0].mxu0
        %v1967 = vadd.f32 0.0, %v1966
        %v1968 = vpop.f32.mrb[0].mxu0
        %v1969 = vpop.f32.mrb[0].mxu0
        %v1970 = vadd.f32 0.0, %v1969
        %v1971 = vpop.f32.mrb[0].mxu0
        %1972 = vmatprep.mubr.bf16.mxu0 0
        %1973 = vmatmul.mubr.bf16.gmra.mrb[0].mxu0 %v1804
        %v1974 = vpop.f32.mrb[0].mxu0
        %v1975 = vadd.f32 0.0, %v1974
        %v1976 = vpop.f32.mrb[0].mxu0
        %v1977 = vpop.f32.mrb[0].mxu0
        %v1978 = vadd.f32 0.0, %v1977
        %v1979 = vpop.f32.mrb[0].mxu0
        %1980 = vmatprep.mubr.bf16.mxu0 0
        %1981 = vmatmul.mubr.bf16.gmra.mrb[0].mxu0 %v1805
        %v1982 = vpop.f32.mrb[0].mxu0
        %v1983 = vadd.f32 0.0, %v1982
        %v1984 = vpop.f32.mrb[0].mxu0
        %v1985 = vpop.f32.mrb[0].mxu0
        %v1986 = vadd.f32 0.0, %v1985
        %v1987 = vpop.f32.mrb[0].mxu0
        %1988 = vmatprep.mubr.bf16.mxu0 0
        %1989 = vmatmul.mubr.bf16.gmra.mrb[0].mxu0 %v1806
        %v1990 = vpop.f32.mrb[0].mxu0
        %v1991 = vadd.f32 0.0, %v1990
        %v1992 = vpop.f32.mrb[0].mxu0
        %v1993 = vpop.f32.mrb[0].mxu0
        %v1994 = vadd.f32 0.0, %v1993
        %v1995 = vpop.f32.mrb[0].mxu0
        %1996 = vmatprep.mubr.bf16.mxu0 0
        %1997 = vmatmul.mubr.bf16.gmra.mrb[0].mxu0 %v1807
        %v1998 = vpop.f32.mrb[0].mxu0
        %v1999 = vadd.f32 0.0, %v1998
        %v2000 = vpop.f32.mrb[0].mxu0
        %v2001 = vpop.f32.mrb[0].mxu0
        %v2002 = vadd.f32 0.0, %v2001
        %v2003 = vpop.f32.mrb[0].mxu0
        %2004 = vmatprep.mubr.bf16.mxu0 0
        %2005 = vmatmul.mubr.bf16.gmra.mrb[0].mxu0 %v1808
        %v2006 = vpop.f32.mrb[0].mxu0
        %v2007 = vadd.f32 0.0, %v2006
        %v2008 = vpop.f32.mrb[0].mxu0
        %v2009 = vpop.f32.mrb[0].mxu0
        %v2010 = vadd.f32 0.0, %v2009
        %v2011 = vpop.f32.mrb[0].mxu0
        %2012 = vmatprep.mubr.bf16.mxu0 0
        %2013 = vmatmul.mubr.bf16.gmra.mrb[0].mxu0 %v1809
        %v2014 = vpop.f32.mrb[0].mxu0
        %v2015 = vadd.f32 0.0, %v2014
        %v2016 = vpop.f32.mrb[0].mxu0
        %v2017 = vpop.f32.mrb[0].mxu0
        %v2018 = vadd.f32 0.0, %v2017
        %v2019 = vpop.f32.mrb[0].mxu0
        %2020 = vmatprep.mubr.bf16.mxu0 0
        %2021 = vmatmul.mubr.bf16.gmra.mrb[0].mxu0 %v1810
        %v2022 = vpop.f32.mrb[0].mxu0
        %v2023 = vadd.f32 0.0, %v2022
        %v2024 = vpop.f32.mrb[0].mxu0
        %v2025 = vpop.f32.mrb[0].mxu0
        %v2026 = vadd.f32 0.0, %v2025
        %v2027 = vpop.f32.mrb[0].mxu0
        %2028 = vmatprep.mubr.bf16.mxu0 0
        %2029 = vmatmul.mubr.bf16.gmra.mrb[0].mxu0 %v1811
        %v2030 = vpop.f32.mrb[0].mxu0
        %v2031 = vadd.f32 0.0, %v2030
        %v2032 = vpop.f32.mrb[0].mxu0
        %v2033 = vpop.f32.mrb[0].mxu0
        %v2034 = vadd.f32 0.0, %v2033
        %v2035 = vpop.f32.mrb[0].mxu0
        %2036 = vdwg.mxu0
        %v2037 = vadd.f32 %v1911, %v1914
        %v2038 = vadd.f32 %v2037, %v1919
        %v2039 = vadd.f32 %v2038, %v1922
        %v2040 = vadd.f32 %v2039, %v1927
        %v2041 = vadd.f32 %v2040, %v1930
        %v2042 = vadd.f32 %v2041, %v1935
        %v2043 = vadd.f32 %v2042, %v1938
        %v2044 = vadd.f32 %v2043, %v1943
        %v2045 = vadd.f32 %v2044, %v1946
        %v2046 = vadd.f32 %v2045, %v1951
        %v2047 = vadd.f32 %v2046, %v1954
        %v2048 = vadd.f32 %v2047, %v1959
        %v2049 = vadd.f32 %v2048, %v1962
        %v2050 = vadd.f32 %v2049, %v1967
        %v2051 = vadd.f32 %v2050, %v1970
        %v2052 = vadd.f32 %v2051, %v1975
        %v2053 = vadd.f32 %v2052, %v1978
        %v2054 = vadd.f32 %v2053, %v1983
        %v2055 = vadd.f32 %v2054, %v1986
        %v2056 = vadd.f32 %v2055, %v1991
        %v2057 = vadd.f32 %v2056, %v1994
        %v2058 = vadd.f32 %v2057, %v1999
        %v2059 = vadd.f32 %v2058, %v2002
        %v2060 = vadd.f32 %v2059, %v2007
        %v2061 = vadd.f32 %v2060, %v2010
        %v2062 = vadd.f32 %v2061, %v2015
        %v2063 = vadd.f32 %v2062, %v2018
        %v2064 = vadd.f32 %v2063, %v2023
        %v2065 = vadd.f32 %v2064, %v2026
        %v2066 = vadd.f32 %v2065, %v2031
        %v2067 = vadd.f32 %v2066, %v2034
        %v2068 = vrot.slane %v2067, 4
        %v2069 = vadd.f32 %v2067, %v2068
        %v2070 = vrot.slane %v2069, 2
        %v2071 = vadd.f32 %v2069, %v2070
        %v2072 = vrot.slane %v2071, 1
        %v2073 = vadd.f32 %v2071, %v2072
        %v2074 = vmul.f32 %v2073, 0.00390625
        %v2075 = vsub.f32 %v1911, %v2074
        %v2076 = vsub.f32 %v1914, %v2074
        %v2077 = vsub.f32 %v1919, %v2074
        %v2078 = vsub.f32 %v1922, %v2074
        %v2079 = vsub.f32 %v1927, %v2074
        %v2080 = vsub.f32 %v1930, %v2074
        %v2081 = vsub.f32 %v1935, %v2074
        %v2082 = vsub.f32 %v1938, %v2074
        %v2083 = vsub.f32 %v1943, %v2074
        %v2084 = vsub.f32 %v1946, %v2074
        %v2085 = vsub.f32 %v1951, %v2074
        %v2086 = vsub.f32 %v1954, %v2074
        %v2087 = vsub.f32 %v1959, %v2074
        %v2088 = vsub.f32 %v1962, %v2074
        %v2089 = vsub.f32 %v1967, %v2074
        %v2090 = vsub.f32 %v1970, %v2074
        %v2091 = vsub.f32 %v1975, %v2074
        %v2092 = vsub.f32 %v1978, %v2074
        %v2093 = vsub.f32 %v1983, %v2074
        %v2094 = vsub.f32 %v1986, %v2074
        %v2095 = vsub.f32 %v1991, %v2074
        %v2096 = vsub.f32 %v1994, %v2074
        %v2097 = vsub.f32 %v1999, %v2074
        %v2098 = vsub.f32 %v2002, %v2074
        %v2099 = vsub.f32 %v2007, %v2074
        %v2100 = vsub.f32 %v2010, %v2074
        %v2101 = vsub.f32 %v2015, %v2074
        %v2102 = vsub.f32 %v2018, %v2074
        %v2103 = vsub.f32 %v2023, %v2074
        %v2104 = vsub.f32 %v2026, %v2074
        %v2105 = vsub.f32 %v2031, %v2074
        %v2106 = vsub.f32 %v2034, %v2074
        %2107 = vst [vmem:[%s166] sm:$0x1] %v2073
        %v2108 = vmul.f32 %v2075, %v2075
        %v2109 = vmul.f32 %v2076, %v2076
        %v2110 = vmul.f32 %v2077, %v2077
        %v2111 = vmul.f32 %v2078, %v2078
        %v2112 = vmul.f32 %v2079, %v2079
        %v2113 = vmul.f32 %v2080, %v2080
        %v2114 = vmul.f32 %v2081, %v2081
        %v2115 = vmul.f32 %v2082, %v2082
        %v2116 = vmul.f32 %v2083, %v2083
        %v2117 = vmul.f32 %v2084, %v2084
        %v2118 = vmul.f32 %v2085, %v2085
        %v2119 = vmul.f32 %v2086, %v2086
        %v2120 = vmul.f32 %v2087, %v2087
        %v2121 = vmul.f32 %v2088, %v2088
        %v2122 = vmul.f32 %v2089, %v2089
        %v2123 = vmul.f32 %v2090, %v2090
        %v2124 = vmul.f32 %v2091, %v2091
        %v2125 = vmul.f32 %v2092, %v2092
        %v2126 = vmul.f32 %v2093, %v2093
        %v2127 = vmul.f32 %v2094, %v2094
        %v2128 = vmul.f32 %v2095, %v2095
        %v2129 = vmul.f32 %v2096, %v2096
        %v2130 = vmul.f32 %v2097, %v2097
        %v2131 = vmul.f32 %v2098, %v2098
        %v2132 = vmul.f32 %v2099, %v2099
        %v2133 = vmul.f32 %v2100, %v2100
        %v2134 = vmul.f32 %v2101, %v2101
        %v2135 = vmul.f32 %v2102, %v2102
        %v2136 = vmul.f32 %v2103, %v2103
        %v2137 = vmul.f32 %v2104, %v2104
        %v2138 = vmul.f32 %v2105, %v2105
        %v2139 = vmul.f32 %v2106, %v2106
        %v2140 = vadd.f32 %v2108, %v2109
        %v2141 = vadd.f32 %v2140, %v2110
        %v2142 = vadd.f32 %v2141, %v2111
        %v2143 = vadd.f32 %v2142, %v2112
        %v2144 = vadd.f32 %v2143, %v2113
        %v2145 = vadd.f32 %v2144, %v2114
        %v2146 = vadd.f32 %v2145, %v2115
        %v2147 = vadd.f32 %v2146, %v2116
        %v2148 = vadd.f32 %v2147, %v2117
        %v2149 = vadd.f32 %v2148, %v2118
        %v2150 = vadd.f32 %v2149, %v2119
        %v2151 = vadd.f32 %v2150, %v2120
        %v2152 = vadd.f32 %v2151, %v2121
        %v2153 = vadd.f32 %v2152, %v2122
        %v2154 = vadd.f32 %v2153, %v2123
        %v2155 = vadd.f32 %v2154, %v2124
        %v2156 = vadd.f32 %v2155, %v2125
        %v2157 = vadd.f32 %v2156, %v2126
        %v2158 = vadd.f32 %v2157, %v2127
        %v2159 = vadd.f32 %v2158, %v2128
        %v2160 = vadd.f32 %v2159, %v2129
        %v2161 = vadd.f32 %v2160, %v2130
        %v2162 = vadd.f32 %v2161, %v2131
        %v2163 = vadd.f32 %v2162, %v2132
        %v2164 = vadd.f32 %v2163, %v2133
        %v2165 = vadd.f32 %v2164, %v2134
        %v2166 = vadd.f32 %v2165, %v2135
        %v2167 = vadd.f32 %v2166, %v2136
        %v2168 = vadd.f32 %v2167, %v2137
        %v2169 = vadd.f32 %v2168, %v2138
        %v2170 = vadd.f32 %v2169, %v2139
        %v2171 = vrot.slane %v2170, 4
        %v2172 = vadd.f32 %v2170, %v2171
        %v2173 = vrot.slane %v2172, 2
        %v2174 = vadd.f32 %v2172, %v2173
        %v2175 = vrot.slane %v2174, 1
        %v2176 = vadd.f32 %v2174, %v2175
        %2177 = vst [vmem:[%s172] sm:$0x1] %v2176
        %s2178 = sand.u32 %s76, 1
        %s2179 = scalar_lea.sflag [#allocation4], %s2178
        %s2180 = sand.u32 %s76, 1
        %s2181 = scalar_lea.vmem [#allocation3], %s2180
        %s2182 = sand.u32 %s102, 1
        %s2183 = scalar_lea.sflag [#allocation6], %s2182
        %s2184 = sand.u32 %s102, 1
        %s2185 = scalar_lea.vmem [#allocation5], %s2184
        // Predicated region
        $region29: #{tpu_custom_call.1} parent=27 // pred_check
          %p2186 = pneg %p86
        $region30: #{tpu_custom_call.1} parent=27 // pred_check_branch
          %2188 = sbr.rel (%p2186) target = $region32
        $region31: #{tpu_custom_call.1} parent=27 // pred_region
          %s2190 = ssub.s32 16, 16
          %2191 = vsyncadd %s2179, %s2190
          %s2192 = smul.addr %s21, 16
          %s2193 = scalar_lea.hbm %s2, %s2192
          %s2195 = sshll.u32 %s2181, 4
          %s2196 = int_to_ptr.vmem [resolvable:$true] %s2195
          %2198 = dma.vmem_to_hbm [thread:$0]  %s2196, 16, %s2193, %s2179
        $region32: #{tpu_custom_call.1} parent=27 // pred_fallthru
          _
        // Predicated region
        $region33: #{tpu_custom_call.1} parent=27 // pred_check
          %p2199 = pneg %p112
        $region34: #{tpu_custom_call.1} parent=27 // pred_check_branch
          %2201 = sbr.rel (%p2199) target = $region36
        $region35: #{tpu_custom_call.1} parent=27 // pred_region
          %s2203 = ssub.s32 16, 16
          %2204 = vsyncadd %s2183, %s2203
          %s2205 = smul.addr %s21, 16
          %s2206 = scalar_lea.hbm %s3, %s2205
          %s2208 = sshll.u32 %s2185, 4
          %s2209 = int_to_ptr.vmem [resolvable:$true] %s2208
          %2211 = dma.vmem_to_hbm [thread:$0]  %s2209, 16, %s2206, %s2183
        $region36: #{tpu_custom_call.1} parent=27 // pred_fallthru
          _
      $region28: #{tpu_custom_call.1} parent=5 // pred_fallthru
        _
      %p2212 = scmp.le.s32.totalorder 2, %s16
      // Predicated region
      $region37: #{tpu_custom_call.1} parent=5 // pred_check
        %p2213 = pneg %p2212
      $region38: #{tpu_custom_call.1} parent=5 // pred_check_branch
        %2215 = sbr.rel (%p2213) target = $region40
      $region39: #{tpu_custom_call.1} parent=5 // pred_region
        %s2216 = ssub.s32 %s16, 2
        // Predicated region
        $region41: #{tpu_custom_call.1} parent=39 // pred_check
          %p2217 = pneg %p92
        $region42: #{tpu_custom_call.1} parent=39 // pred_check_branch
          %2219 = sbr.rel (%p2217) target = $region44
        $region43: #{tpu_custom_call.1} parent=39 // pred_region
          %s2220 = sand.u32 %s77, 1
          %s2221 = scalar_lea.sflag [#allocation4], %s2220
          %s2222 = sand.u32 %s77, 1
          %s2223 = scalar_lea.vmem [#allocation3], %s2222
          %2224 = dma.done %s2221, 16
        $region44: #{tpu_custom_call.1} parent=39 // pred_fallthru
          _
        // Predicated region
        $region45: #{tpu_custom_call.1} parent=39 // pred_check
          %p2225 = pneg %p118
        $region46: #{tpu_custom_call.1} parent=39 // pred_check_branch
          %2227 = sbr.rel (%p2225) target = $region48
        $region47: #{tpu_custom_call.1} parent=39 // pred_region
          %s2228 = sand.u32 %s103, 1
          %s2229 = scalar_lea.sflag [#allocation6], %s2228
          %s2230 = sand.u32 %s103, 1
          %s2231 = scalar_lea.vmem [#allocation5], %s2230
          %2232 = dma.done %s2229, 16
        $region48: #{tpu_custom_call.1} parent=39 // pred_fallthru
          _
      $region40: #{tpu_custom_call.1} parent=5 // pred_fallthru
        _
    $region6: #{tpu_custom_call.1} parent=1 // loop_footer
      %s20 = sadd.s32 1, %s16
    $region7: #{tpu_custom_call.1} parent=1 // loop_footer_branch
      %15 = sbr.rel target = $region3
    $region8: #{tpu_custom_call.1} parent=1 // loop_exit
      _
    %2233 = vsyncpa [#allocation4], 1
    %s2234 = scalar_lea.sflag [#allocation4], 1
    %2235 = vsyncpa %s2234, 1
    %2236 = vsyncpa [#allocation6], 1
    %s2237 = scalar_lea.sflag [#allocation6], 1
    %2238 = vsyncpa %s2237, 1

</llo_original>
